<compile_context>
chip_gen: v7x
topology: tpu7x:2x2x1
jax: 0.10.0
libtpu: 0.0.40
codegen_flags: <defaults>
</compile_context>

<pallas_src>
import functools
import math

import jax
import jax.numpy as jnp
from jax import lax
from jax.experimental import pallas as pl
from jax.experimental.pallas import tpu as pltpu

EPS = 1e-5
_VMEM_LIMIT = 32 * 1024 * 1024  # safe scoped-VMEM limit on v5e/v6e/v7x


def _round_up(x, m):
    return (x + m - 1) // m * m


# --------------------------------------------------------------------------
# LayerNorm
# --------------------------------------------------------------------------
def _layernorm_kernel(x_ref, g_ref, b_ref, o_ref):
    # x_ref : (tile_rows, dim)   g_ref / b_ref : (1, dim)
    x = x_ref[...].astype(jnp.float32)
    mean = jnp.mean(x, axis=-1, keepdims=True)
    xc = x - mean
    var = jnp.mean(xc * xc, axis=-1, keepdims=True)
    inv = lax.rsqrt(var + EPS)
    gamma = g_ref[...]
    beta = b_ref[...]
    if gamma.dtype != jnp.float32:
        gamma = gamma.astype(jnp.float32)
    if beta.dtype != jnp.float32:
        beta = beta.astype(jnp.float32)
    o_ref[...] = (xc * inv * gamma + beta).astype(o_ref.dtype)


def layer_norm(x, gamma, beta):
    """LayerNorm over the last axis of x (any leading shape)."""
    orig_shape = x.shape
    dim = orig_shape[-1]
    rows = 1
    for s in orig_shape[:-1]:
        rows *= s

    x2 = x.reshape(rows, dim)
    g2 = gamma.reshape(1, dim)
    b2 = beta.reshape(1, dim)

    # Row tile sized from a ~8 MiB VMEM budget across in+out double buffers.
    itemsize = jnp.dtype(x.dtype).itemsize
    budget = 8 * 1024 * 1024
    tr = (budget // 4) // max(dim * itemsize, 1)
    tr = max(8, min(2048, (tr // 8) * 8))         # multiple of 8 rows

    if rows <= tr:
        tr = rows                                  # full-extent block is always legal
        rows_p = rows
    else:
        rows_p = _round_up(rows, tr)               # pad rows instead of shrinking tile

    if rows_p != rows:
        x2 = jnp.pad(x2, ((0, rows_p - rows), (0, 0)))

    out = pl.pallas_call(
        _layernorm_kernel,
        out_shape=jax.ShapeDtypeStruct((rows_p, dim), x.dtype),
        grid_spec=pltpu.PrefetchScalarGridSpec(
            num_scalar_prefetch=0,
            grid=(rows_p // tr,),
            in_specs=[
                pl.BlockSpec((tr, dim), lambda i: (i, 0)),
                pl.BlockSpec((1, dim), lambda i: (0, 0)),
                pl.BlockSpec((1, dim), lambda i: (0, 0)),
            ],
            out_specs=pl.BlockSpec((tr, dim), lambda i: (i, 0)),
        ),
        compiler_params=pltpu.CompilerParams(
            dimension_semantics=("parallel",),
            vmem_limit_bytes=_VMEM_LIMIT,
        ),
    )(x2, g2, b2)

    if rows_p != rows:
        out = out[:rows]
    return out.reshape(orig_shape)


# --------------------------------------------------------------------------
# Linear (tiled matmul + fused bias / activation epilogue)
# --------------------------------------------------------------------------
def _gelu_tanh(x):
    # TODO(synk): torch nn.GELU() is erf-exact; tanh approximation is used here
    # (guaranteed EUP lowering), max abs deviation ~1e-3.
    c = math.sqrt(2.0 / math.pi)
    return 0.5 * x * (1.0 + jnp.tanh(c * (x + 0.044715 * x * x * x)))


def _make_linear_kernel(has_bias, activation):
    def kernel(*refs):
        if has_bias:
            x_ref, w_ref, b_ref, o_ref, acc_ref = refs
        else:
            x_ref, w_ref, o_ref, acc_ref = refs
            b_ref = None
        kk = pl.program_id(2)

        @pl.when(kk == 0)
        def _():
            acc_ref[...] = jnp.zeros_like(acc_ref)

        acc_ref[...] += jnp.dot(
            x_ref[...], w_ref[...], preferred_element_type=jnp.float32
        )

        @pl.when(kk == pl.num_programs(2) - 1)
        def _():
            r = acc_ref[...]
            if has_bias:
                r = r + b_ref[...].astype(jnp.float32)
            if activation is not None:
                r = activation(r)
            o_ref[...] = r.astype(o_ref.dtype)

    return kernel


def _pick_tile(size, max_tile):
    # If the dim fits in one tile, use the full extent (always legal),
    # otherwise use max_tile (a multiple of 8/128) and pad to a multiple of it.
    if size <= max_tile:
        return size, size
    return max_tile, _round_up(size, max_tile)


def linear(x2, w, bias=None, activation=None, *, tm=256, tn=256, tk=512):
    """y = activation(x2 @ w + bias);  x2: (M, K), w: (K, N), bias: (N,) or None."""
    M, K = x2.shape
    Kw, N = w.shape
    assert K == Kw
    tm, Mp = _pick_tile(M, tm)
    tn, Np = _pick_tile(N, tn)
    tk, Kp = _pick_tile(K, tk)

    xp = x2 if (Mp == M and Kp == K) else jnp.pad(x2, ((0, Mp - M), (0, Kp - K)))
    wp = w if (Kp == K and Np == N) else jnp.pad(w, ((0, Kp - K), (0, Np - N)))

    in_specs = [
        pl.BlockSpec((tm, tk), lambda i, j, k: (i, k)),
        pl.BlockSpec((tk, tn), lambda i, j, k: (k, j)),
    ]
    args = [xp, wp]
    has_bias = bias is not None
    if has_bias:
        b2 = bias.reshape(1, N)
        if Np != N:
            b2 = jnp.pad(b2, ((0, 0), (0, Np - N)))
        in_specs.append(pl.BlockSpec((1, tn), lambda i, j, k: (0, j)))
        args.append(b2)

    out = pl.pallas_call(
        _make_linear_kernel(has_bias, activation),
        out_shape=jax.ShapeDtypeStruct((Mp, Np), x2.dtype),
        grid_spec=pltpu.PrefetchScalarGridSpec(
            num_scalar_prefetch=0,
            grid=(Mp // tm, Np // tn, Kp // tk),
            in_specs=in_specs,
            out_specs=pl.BlockSpec((tm, tn), lambda i, j, k: (i, j)),
            scratch_shapes=[pltpu.VMEM((tm, tn), jnp.float32)],
        ),
        compiler_params=pltpu.CompilerParams(
            dimension_semantics=("parallel", "parallel", "arbitrary"),
            vmem_limit_bytes=_VMEM_LIMIT,
        ),
    )(*args)

    if Mp != M or Np != N:
        out = out[:M, :N]
    return out


# --------------------------------------------------------------------------
# Multi-query attention: q (B, H, N, D), shared k/v (B, N, D)
# --------------------------------------------------------------------------
def _mqa_attention_kernel(q_ref, k_ref, v_ref, o_ref, *, scale):
    q = q_ref[0, 0].astype(jnp.float32) * scale       # (n, d)
    k = k_ref[0].astype(jnp.float32)                   # (m, d)
    v = v_ref[0].astype(jnp.float32)                   # (m, d)
    sim = lax.dot_general(
        q, k, (((1,), (1,)), ((), ())), preferred_element_type=jnp.float32
    )                                                  # (n, m)
    sim = sim - jnp.max(sim, axis=-1, keepdims=True)
    p = jnp.exp(sim)
    attn = p / jnp.sum(p, axis=-1, keepdims=True)
    out = jnp.dot(attn, v, preferred_element_type=jnp.float32)  # (n, d)
    o_ref[0, 0] = out.astype(o_ref.dtype)


def mqa_attention(q, k, v, *, scale):
    # TODO(synk): attn_mask / attn_bias / causal masking and dropout are not used
    # by this module's config (all None / p=0.0) and are not implemented; for long
    # sequences the KV axis should be tiled flash-attention style instead of
    # holding the full (N, N) score matrix in VMEM.
    B, H, N, D = q.shape
    kernel = functools.partial(_mqa_attention_kernel, scale=scale)
    return pl.pallas_call(
        kernel,
        out_shape=jax.ShapeDtypeStruct((B, H, N, D), q.dtype),
        grid_spec=pltpu.PrefetchScalarGridSpec(
            num_scalar_prefetch=0,
            grid=(B, H),
            in_specs=[
                pl.BlockSpec((1, 1, N, D), lambda b, h: (b, h, 0, 0)),
                pl.BlockSpec((1, N, D), lambda b, h: (b, 0, 0)),
                pl.BlockSpec((1, N, D), lambda b, h: (b, 0, 0)),
            ],
            out_specs=pl.BlockSpec((1, 1, N, D), lambda b, h: (b, h, 0, 0)),
        ),
        compiler_params=pltpu.CompilerParams(
            dimension_semantics=("parallel", "parallel"),
            vmem_limit_bytes=_VMEM_LIMIT,
        ),
    )(q, k, v)


# --------------------------------------------------------------------------
# Transformer forward (Pallas) + parameter init + plain-JAX reference
# --------------------------------------------------------------------------
def init_transformer_params(key, *, dim, dim_head, heads, depth, mult=4):
    inner = dim_head * heads
    ff_inner = int(dim * mult)
    params = []
    for _ in range(depth):
        key, *ks = jax.random.split(key, 9)
        attn = dict(
            ln_g=jnp.ones((dim,), jnp.float32),
            ln_b=jnp.zeros((dim,), jnp.float32),
            wq=jax.random.normal(ks[0], (dim, inner), jnp.float32) / math.sqrt(dim),
            wkv=jax.random.normal(ks[1], (dim, 2 * dim_head), jnp.float32) / math.sqrt(dim),
            wo=jax.random.normal(ks[2], (inner, dim), jnp.float32) / math.sqrt(inner),
        )
        ff = dict(
            ln_g=jnp.ones((dim,), jnp.float32),
            ln_b=jnp.zeros((dim,), jnp.float32),
            w1=jax.random.normal(ks[3], (dim, ff_inner), jnp.float32) / math.sqrt(dim),
            b1=jax.random.normal(ks[4], (ff_inner,), jnp.float32) * 0.01,
            w2=jax.random.normal(ks[5], (ff_inner, dim), jnp.float32) / math.sqrt(ff_inner),
            b2=jax.random.normal(ks[6], (dim,), jnp.float32) * 0.01,
        )
        params.append(dict(attn=attn, ff=ff))
    return params


def transformer_forward(x, params, *, heads, dim_head):
    B, N, dim = x.shape
    scale = dim_head ** (-0.5)
    for layer in params:
        # --- attention block (pre-norm, residual) ---
        a = layer["attn"]
        xn = layer_norm(x, a["ln_g"], a["ln_b"])
        x2 = xn.reshape(B * N, dim)
        q = linear(x2, a["wq"])                       # (B*N, heads*dim_head)
        kv = linear(x2, a["wkv"])                     # (B*N, 2*dim_head)
        q = q.reshape(B, N, heads, dim_head).transpose(0, 2, 1, 3)
        k = kv[:, :dim_head].reshape(B, N, dim_head)
        v = kv[:, dim_head:].reshape(B, N, dim_head)
        o = mqa_attention(q, k, v, scale=scale)       # (B, H, N, D)
        o = o.transpose(0, 2, 1, 3).reshape(B * N, heads * dim_head)
        attn_out = linear(o, a["wo"]).reshape(B, N, dim)
        x = attn_out + x

        # --- feed-forward block (pre-norm, residual) ---
        f = layer["ff"]
        xn = layer_norm(x, f["ln_g"], f["ln_b"])
        h1 = linear(xn.reshape(B * N, dim), f["w1"], f["b1"], activation=_gelu_tanh)
        ff_out = linear(h1, f["w2"], f["b2"]).reshape(B, N, dim)
        x = ff_out + x
    return x


def reference_forward(x, params, *, heads, dim_head):
    hp = lax.Precision.HIGHEST
    scale = dim_head ** (-0.5)

    def ln(t, g, b):
        m = jnp.mean(t, axis=-1, keepdims=True)
        v = jnp.mean((t - m) ** 2, axis=-1, keepdims=True)
        return (t - m) / jnp.sqrt(v + EPS) * g + b

    B, N, dim = x.shape
    for layer in params:
        a = layer["attn"]
        xn = ln(x, a["ln_g"], a["ln_b"])
        q = jnp.einsum("bnd,de->bne", xn, a["wq"], precision=hp)
        kv = jnp.einsum("bnd,de->bne", xn, a["wkv"], precision=hp)
        q = q.reshape(B, N, heads, dim_head).transpose(0, 2, 1, 3) * scale
        k, v = kv[..., :dim_head], kv[..., dim_head:]
        sim = jnp.einsum("bhid,bjd->bhij", q, k, precision=hp)
        attn = jax.nn.softmax(sim, axis=-1)
        o = jnp.einsum("bhij,bjd->bhid", attn, v, precision=hp)
        o = o.transpose(0, 2, 1, 3).reshape(B, N, heads * dim_head)
        x = jnp.einsum("bne,ed->bnd", o, a["wo"], precision=hp) + x

        f = layer["ff"]
        xn = ln(x, f["ln_g"], f["ln_b"])
        h1 = _gelu_tanh(jnp.einsum("bnd,de->bne", xn, f["w1"], precision=hp) + f["b1"])
        x = jnp.einsum("bne,ed->bnd", h1, f["w2"], precision=hp) + f["b2"] + x
    return x


if __name__ == "__main__":
    key = jax.random.PRNGKey(0)

    batch, seq, dim = 2, 8, 32
    heads, dim_head, depth = 4, 16, 2

    key, xk, pk = jax.random.split(key, 3)
    x = jax.random.normal(xk, (batch, seq, dim), dtype=jnp.float32)
    params = init_transformer_params(
        pk, dim=dim, dim_head=dim_head, heads=heads, depth=depth
    )

    fwd = jax.jit(functools.partial(transformer_forward, heads=heads, dim_head=dim_head))
    out = jax.block_until_ready(fwd(x, params))

    ref = reference_forward(x, params, heads=heads, dim_head=dim_head)
    assert out.shape == x.shape and out.dtype == x.dtype
    max_err = float(jnp.max(jnp.abs(out - ref)))
    assert max_err < 5e-2, f"mismatch vs reference: max abs err {max_err}"

    print("KERNEL_OK")
</pallas_src>

<mosaic_0001>
module attributes {stable_mosaic.version = 11 : i64} {
  func.func @kernel(%arg0: i32, %arg1: i32, %arg2: i32, %arg3: memref<16x32xf32, #tpu.memory_space<vmem>>, %arg4: memref<32x32xf32, #tpu.memory_space<vmem>>, %arg5: memref<16x32xf32, #tpu.memory_space<vmem>>, %arg6: memref<16x32xf32, #tpu.memory_space<vmem>>) attributes {dimension_semantics = [#tpu.dimension_semantics<parallel>, #tpu.dimension_semantics<parallel>, #tpu.dimension_semantics<arbitrary>], iteration_bounds = array<i64: 1, 1, 1>, scalar_prefetch = 0 : i64, scratch_operands = 1 : i64, tpu.core_type = #tpu.core_type<tc>, window_params = [{transform_indices = @transform_0, window_bounds = array<i64: 16, 32>}, {transform_indices = @transform_1, window_bounds = array<i64: 32, 32>}, {transform_indices = @transform_2, window_bounds = array<i64: 16, 32>}]} {
    %c0_i32 = arith.constant 0 : i32
    %0 = arith.cmpi eq, %arg2, %c0_i32 : i32
    %1 = arith.extui %0 : i1 to i32
    %c0_i32_0 = arith.constant 0 : i32
    %2 = arith.cmpi ne, %1, %c0_i32_0 : i32
    scf.if %2 {
      %cst_10 = arith.constant 0.000000e+00 : f32
      %12 = vector.broadcast %cst_10 : f32 to vector<16x32xf32>
      %c0_11 = arith.constant 0 : index
      %c0_12 = arith.constant 0 : index
      %13 = vector.load %arg6[%c0_11, %c0_12] : memref<16x32xf32, #tpu.memory_space<vmem>>, vector<16x32xf32>
      tpu.vector_store %arg6[%c0_11, %c0_12], %12 {strides = array<i32>} : memref<16x32xf32, #tpu.memory_space<vmem>>, vector<16x32xf32>,
    } else {
    }
    %c0 = arith.constant 0 : index
    %c0_1 = arith.constant 0 : index
    %3 = vector.load %arg6[%c0, %c0_1] : memref<16x32xf32, #tpu.memory_space<vmem>>, vector<16x32xf32>
    %c0_2 = arith.constant 0 : index
    %c0_3 = arith.constant 0 : index
    %4 = vector.load %arg3[%c0_2, %c0_3] : memref<16x32xf32, #tpu.memory_space<vmem>>, vector<16x32xf32>
    %c0_4 = arith.constant 0 : index
    %c0_5 = arith.constant 0 : index
    %5 = vector.load %arg4[%c0_4, %c0_5] : memref<32x32xf32, #tpu.memory_space<vmem>>, vector<32x32xf32>
    %cst = arith.constant dense<0.000000e+00> : vector<16x32xf32>
    %6 = tpu.matmul %4, %5, %cst {dimension_numbers = #tpu.dot_dimension_numbers<[1], [0], [0], [1], [0, 0, 1, 1], [], []>} : vector<16x32xf32>, vector<32x32xf32>, vector<16x32xf32> -> vector<16x32xf32>
    %7 = arith.addf %3, %6 : vector<16x32xf32>
    %c0_6 = arith.constant 0 : index
    %c0_7 = arith.constant 0 : index
    %8 = vector.load %arg6[%c0_6, %c0_7] : memref<16x32xf32, #tpu.memory_space<vmem>>, vector<16x32xf32>
    tpu.vector_store %arg6[%c0_6, %c0_7], %7 {strides = array<i32>} : memref<16x32xf32, #tpu.memory_space<vmem>>, vector<16x32xf32>,
    %c0_i32_8 = arith.constant 0 : i32
    %9 = arith.cmpi eq, %arg2, %c0_i32_8 : i32
    %10 = arith.extui %9 : i1 to i32
    %c0_i32_9 = arith.constant 0 : i32
    %11 = arith.cmpi ne, %10, %c0_i32_9 : i32
    scf.if %11 {
      %c0_10 = arith.constant 0 : index
      %c0_11 = arith.constant 0 : index
      %12 = vector.load %arg6[%c0_10, %c0_11] : memref<16x32xf32, #tpu.memory_space<vmem>>, vector<16x32xf32>
      %c0_12 = arith.constant 0 : index
      %c0_13 = arith.constant 0 : index
      %13 = vector.load %arg5[%c0_12, %c0_13] : memref<16x32xf32, #tpu.memory_space<vmem>>, vector<16x32xf32>
      tpu.vector_store %arg5[%c0_12, %c0_13], %12 {strides = array<i32>} : memref<16x32xf32, #tpu.memory_space<vmem>>, vector<16x32xf32>,
    } else {
    }
    return
  }
  func.func @transform_0(%arg0: i32, %arg1: i32, %arg2: i32) -> (i32, i32) {
    %c0_i32 = arith.constant 0 : i32
    return %arg0, %arg2 : i32, i32
  }
  func.func @transform_1(%arg0: i32, %arg1: i32, %arg2: i32) -> (i32, i32) {
    %c0_i32 = arith.constant 0 : i32
    return %arg2, %arg1 : i32, i32
  }
  func.func @transform_2(%arg0: i32, %arg1: i32, %arg2: i32) -> (i32, i32) {
    %c0_i32 = arith.constant 0 : i32
    return %arg0, %arg1 : i32, i32
  }
}

module attributes {stable_mosaic.version = 11 : i64} {
  func.func @_layernorm_kernel(%arg0: i32, %arg1: memref<16x32xf32, #tpu.memory_space<vmem>>, %arg2: memref<1x32xf32, #tpu.memory_space<vmem>>, %arg3: memref<1x32xf32, #tpu.memory_space<vmem>>, %arg4: memref<16x32xf32, #tpu.memory_space<vmem>>) attributes {dimension_semantics = [#tpu.dimension_semantics<parallel>], iteration_bounds = array<i64: 1>, scalar_prefetch = 0 : i64, scratch_operands = 0 : i64, tpu.core_type = #tpu.core_type<tc>, window_params = [{transform_indices = @transform_0, window_bounds = array<i64: 16, 32>}, {pipeline_mode = #tpu.pipeline_mode<synchronous>, transform_indices = @transform_1, window_bounds = array<i64: 1, 32>}, {pipeline_mode = #tpu.pipeline_mode<synchronous>, transform_indices = @transform_2, window_bounds = array<i64: 1, 32>}, {transform_indices = @transform_3, window_bounds = array<i64: 16, 32>}]} {
    %c0 = arith.constant 0 : index
    %c0_0 = arith.constant 0 : index
    %0 = vector.load %arg1[%c0, %c0_0] : memref<16x32xf32, #tpu.memory_space<vmem>>, vector<16x32xf32>
    %cst = arith.constant dense<0.000000e+00> : vector<16xf32>
    %1 = vector.multi_reduction <add>, %0, %cst [1] : vector<16x32xf32> to vector<16xf32>
    %2 = vector.shape_cast %1 : vector<16xf32> to vector<16x1xf32>
    %cst_1 = arith.constant 3.200000e+01 : f32
    %3 = vector.broadcast %cst_1 : f32 to vector<16x1xf32>
    %4 = arith.divf %2, %3 : vector<16x1xf32>
    %5 = vector.broadcast %4 : vector<16x1xf32> to vector<16x32xf32>
    %6 = arith.subf %0, %5 : vector<16x32xf32>
    %7 = arith.mulf %6, %6 : vector<16x32xf32>
    %cst_2 = arith.constant dense<0.000000e+00> : vector<16xf32>
    %8 = vector.multi_reduction <add>, %7, %cst_2 [1] : vector<16x32xf32> to vector<16xf32>
    %9 = vector.shape_cast %8 : vector<16xf32> to vector<16x1xf32>
    %cst_3 = arith.constant 3.200000e+01 : f32
    %10 = vector.broadcast %cst_3 : f32 to vector<16x1xf32>
    %11 = arith.divf %9, %10 : vector<16x1xf32>
    %cst_4 = arith.constant 9.99999974E-6 : f32
    %12 = vector.broadcast %cst_4 : f32 to vector<16x1xf32>
    %13 = arith.addf %11, %12 : vector<16x1xf32>
    %14 = math.rsqrt %13 : vector<16x1xf32>
    %c0_5 = arith.constant 0 : index
    %c0_6 = arith.constant 0 : index
    %15 = vector.load %arg2[%c0_5, %c0_6] : memref<1x32xf32, #tpu.memory_space<vmem>>, vector<1x32xf32>
    %c0_7 = arith.constant 0 : index
    %c0_8 = arith.constant 0 : index
    %16 = vector.load %arg3[%c0_7, %c0_8] : memref<1x32xf32, #tpu.memory_space<vmem>>, vector<1x32xf32>
    %17 = vector.broadcast %14 : vector<16x1xf32> to vector<16x32xf32>
    %18 = arith.mulf %6, %17 : vector<16x32xf32>
    %19 = vector.broadcast %15 : vector<1x32xf32> to vector<16x32xf32>
    %20 = arith.mulf %18, %19 : vector<16x32xf32>
    %21 = vector.broadcast %16 : vector<1x32xf32> to vector<16x32xf32>
    %22 = arith.addf %20, %21 : vector<16x32xf32>
    %c0_9 = arith.constant 0 : index
    %c0_10 = arith.constant 0 : index
    %23 = vector.load %arg4[%c0_9, %c0_10] : memref<16x32xf32, #tpu.memory_space<vmem>>, vector<16x32xf32>
    tpu.vector_store %arg4[%c0_9, %c0_10], %22 {strides = array<i32>} : memref<16x32xf32, #tpu.memory_space<vmem>>, vector<16x32xf32>,
    return
  }
  func.func @transform_0(%arg0: i32) -> (i32, i32) {
    %c0_i32 = arith.constant 0 : i32
    %c0_i32_0 = arith.constant 0 : i32
    return %arg0, %c0_i32 : i32, i32
  }
  func.func @transform_1(%arg0: i32) -> (i32, i32) {
    %c0_i32 = arith.constant 0 : i32
    %c0_i32_0 = arith.constant 0 : i32
    %c0_i32_1 = arith.constant 0 : i32
    return %c0_i32, %c0_i32_0 : i32, i32
  }
  func.func @transform_2(%arg0: i32) -> (i32, i32) {
    %c0_i32 = arith.constant 0 : i32
    %c0_i32_0 = arith.constant 0 : i32
    %c0_i32_1 = arith.constant 0 : i32
    return %c0_i32, %c0_i32_0 : i32, i32
  }
  func.func @transform_3(%arg0: i32) -> (i32, i32) {
    %c0_i32 = arith.constant 0 : i32
    %c0_i32_0 = arith.constant 0 : i32
    return %arg0, %c0_i32 : i32, i32
  }
}

module attributes {stable_mosaic.version = 11 : i64} {
  func.func @kernel(%arg0: i32, %arg1: i32, %arg2: i32, %arg3: memref<16x32xf32, #tpu.memory_space<vmem>>, %arg4: memref<32x64xf32, #tpu.memory_space<vmem>>, %arg5: memref<16x64xf32, #tpu.memory_space<vmem>>, %arg6: memref<16x64xf32, #tpu.memory_space<vmem>>) attributes {dimension_semantics = [#tpu.dimension_semantics<parallel>, #tpu.dimension_semantics<parallel>, #tpu.dimension_semantics<arbitrary>], iteration_bounds = array<i64: 1, 1, 1>, scalar_prefetch = 0 : i64, scratch_operands = 1 : i64, tpu.core_type = #tpu.core_type<tc>, window_params = [{transform_indices = @transform_0, window_bounds = array<i64: 16, 32>}, {transform_indices = @transform_1, window_bounds = array<i64: 32, 64>}, {transform_indices = @transform_2, window_bounds = array<i64: 16, 64>}]} {
    %c0_i32 = arith.constant 0 : i32
    %0 = arith.cmpi eq, %arg2, %c0_i32 : i32
    %1 = arith.extui %0 : i1 to i32
    %c0_i32_0 = arith.constant 0 : i32
    %2 = arith.cmpi ne, %1, %c0_i32_0 : i32
    scf.if %2 {
      %cst_10 = arith.constant 0.000000e+00 : f32
      %12 = vector.broadcast %cst_10 : f32 to vector<16x64xf32>
      %c0_11 = arith.constant 0 : index
      %c0_12 = arith.constant 0 : index
      %13 = vector.load %arg6[%c0_11, %c0_12] : memref<16x64xf32, #tpu.memory_space<vmem>>, vector<16x64xf32>
      tpu.vector_store %arg6[%c0_11, %c0_12], %12 {strides = array<i32>} : memref<16x64xf32, #tpu.memory_space<vmem>>, vector<16x64xf32>,
    } else {
    }
    %c0 = arith.constant 0 : index
    %c0_1 = arith.constant 0 : index
    %3 = vector.load %arg6[%c0, %c0_1] : memref<16x64xf32, #tpu.memory_space<vmem>>, vector<16x64xf32>
    %c0_2 = arith.constant 0 : index
    %c0_3 = arith.constant 0 : index
    %4 = vector.load %arg3[%c0_2, %c0_3] : memref<16x32xf32, #tpu.memory_space<vmem>>, vector<16x32xf32>
    %c0_4 = arith.constant 0 : index
    %c0_5 = arith.constant 0 : index
    %5 = vector.load %arg4[%c0_4, %c0_5] : memref<32x64xf32, #tpu.memory_space<vmem>>, vector<32x64xf32>
    %cst = arith.constant dense<0.000000e+00> : vector<16x64xf32>
    %6 = tpu.matmul %4, %5, %cst {dimension_numbers = #tpu.dot_dimension_numbers<[1], [0], [0], [1], [0, 0, 1, 1], [], []>} : vector<16x32xf32>, vector<32x64xf32>, vector<16x64xf32> -> vector<16x64xf32>
    %7 = arith.addf %3, %6 : vector<16x64xf32>
    %c0_6 = arith.constant 0 : index
    %c0_7 = arith.constant 0 : index
    %8 = vector.load %arg6[%c0_6, %c0_7] : memref<16x64xf32, #tpu.memory_space<vmem>>, vector<16x64xf32>
    tpu.vector_store %arg6[%c0_6, %c0_7], %7 {strides = array<i32>} : memref<16x64xf32, #tpu.memory_space<vmem>>, vector<16x64xf32>,
    %c0_i32_8 = arith.constant 0 : i32
    %9 = arith.cmpi eq, %arg2, %c0_i32_8 : i32
    %10 = arith.extui %9 : i1 to i32
    %c0_i32_9 = arith.constant 0 : i32
    %11 = arith.cmpi ne, %10, %c0_i32_9 : i32
    scf.if %11 {
      %c0_10 = arith.constant 0 : index
      %c0_11 = arith.constant 0 : index
      %12 = vector.load %arg6[%c0_10, %c0_11] : memref<16x64xf32, #tpu.memory_space<vmem>>, vector<16x64xf32>
      %c0_12 = arith.constant 0 : index
      %c0_13 = arith.constant 0 : index
      %13 = vector.load %arg5[%c0_12, %c0_13] : memref<16x64xf32, #tpu.memory_space<vmem>>, vector<16x64xf32>
      tpu.vector_store %arg5[%c0_12, %c0_13], %12 {strides = array<i32>} : memref<16x64xf32, #tpu.memory_space<vmem>>, vector<16x64xf32>,
    } else {
    }
    return
  }
  func.func @transform_0(%arg0: i32, %arg1: i32, %arg2: i32) -> (i32, i32) {
    %c0_i32 = arith.constant 0 : i32
    return %arg0, %arg2 : i32, i32
  }
  func.func @transform_1(%arg0: i32, %arg1: i32, %arg2: i32) -> (i32, i32) {
    %c0_i32 = arith.constant 0 : i32
    return %arg2, %arg1 : i32, i32
  }
  func.func @transform_2(%arg0: i32, %arg1: i32, %arg2: i32) -> (i32, i32) {
    %c0_i32 = arith.constant 0 : i32
    return %arg0, %arg1 : i32, i32
  }
}

module attributes {stable_mosaic.version = 11 : i64} {
  func.func @_mqa_attention_kernel(%arg0: i32, %arg1: i32, %arg2: memref<1x1x8x16xf32, #tpu.memory_space<vmem>>, %arg3: memref<1x8x16xf32, #tpu.memory_space<vmem>>, %arg4: memref<1x8x16xf32, #tpu.memory_space<vmem>>, %arg5: memref<1x1x8x16xf32, #tpu.memory_space<vmem>>) attributes {dimension_semantics = [#tpu.dimension_semantics<parallel>, #tpu.dimension_semantics<parallel>], iteration_bounds = array<i64: 2, 4>, scalar_prefetch = 0 : i64, scratch_operands = 0 : i64, tpu.core_type = #tpu.core_type<tc>, window_params = [{transform_indices = @transform_0, window_bounds = array<i64: 1, 1, 8, 16>}, {transform_indices = @transform_1, window_bounds = array<i64: 1, 8, 16>}, {transform_indices = @transform_2, window_bounds = array<i64: 1, 8, 16>}, {transform_indices = @transform_3, window_bounds = array<i64: 1, 1, 8, 16>}]} {
    %c0 = arith.constant 0 : index
    %c0_0 = arith.constant 0 : index
    %c0_1 = arith.constant 0 : index
    %c0_2 = arith.constant 0 : index
    %0 = vector.load %arg2[%c0, %c0_0, %c0_1, %c0_2] : memref<1x1x8x16xf32, #tpu.memory_space<vmem>>, vector<1x1x8x16xf32>
    %1 = vector.shape_cast %0 : vector<1x1x8x16xf32> to vector<8x16xf32>
    %cst = arith.constant 2.500000e-01 : f32
    %2 = vector.broadcast %cst : f32 to vector<8x16xf32>
    %3 = arith.mulf %1, %2 : vector<8x16xf32>
    %c0_3 = arith.constant 0 : index
    %c0_4 = arith.constant 0 : index
    %c0_5 = arith.constant 0 : index
    %4 = vector.load %arg3[%c0_3, %c0_4, %c0_5] : memref<1x8x16xf32, #tpu.memory_space<vmem>>, vector<1x8x16xf32>
    %5 = vector.shape_cast %4 : vector<1x8x16xf32> to vector<8x16xf32>
    %c0_6 = arith.constant 0 : index
    %c0_7 = arith.constant 0 : index
    %c0_8 = arith.constant 0 : index
    %6 = vector.load %arg4[%c0_6, %c0_7, %c0_8] : memref<1x8x16xf32, #tpu.memory_space<vmem>>, vector<1x8x16xf32>
    %7 = vector.shape_cast %6 : vector<1x8x16xf32> to vector<8x16xf32>
    %cst_9 = arith.constant dense<0.000000e+00> : vector<8x8xf32>
    %8 = tpu.matmul %3, %5, %cst_9 {dimension_numbers = #tpu.dot_dimension_numbers<[1], [1], [0], [0], [0, 0, 1, 0], [], []>} : vector<8x16xf32>, vector<8x16xf32>, vector<8x8xf32> -> vector<8x8xf32>
    %cst_10 = arith.constant dense<0xFF800000> : vector<8xf32>
    %9 = vector.multi_reduction <maximumf>, %8, %cst_10 [1] : vector<8x8xf32> to vector<8xf32>
    %10 = vector.shape_cast %9 : vector<8xf32> to vector<8x1xf32>
    %11 = vector.broadcast %10 : vector<8x1xf32> to vector<8x8xf32>
    %12 = arith.subf %8, %11 : vector<8x8xf32>
    %13 = math.exp %12 : vector<8x8xf32>
    %cst_11 = arith.constant dense<0.000000e+00> : vector<8xf32>
    %14 = vector.multi_reduction <add>, %13, %cst_11 [1] : vector<8x8xf32> to vector<8xf32>
    %15 = vector.shape_cast %14 : vector<8xf32> to vector<8x1xf32>
    %16 = vector.broadcast %15 : vector<8x1xf32> to vector<8x8xf32>
    %17 = arith.divf %13, %16 : vector<8x8xf32>
    %cst_12 = arith.constant dense<0.000000e+00> : vector<8x16xf32>
    %18 = tpu.matmul %17, %7, %cst_12 {dimension_numbers = #tpu.dot_dimension_numbers<[1], [0], [0], [1], [0, 0, 1, 1], [], []>} : vector<8x8xf32>, vector<8x16xf32>, vector<8x16xf32> -> vector<8x16xf32>
    %c0_13 = arith.constant 0 : index
    %c0_14 = arith.constant 0 : index
    %c0_15 = arith.constant 0 : index
    %c0_16 = arith.constant 0 : index
    %19 = vector.load %arg5[%c0_13, %c0_14, %c0_15, %c0_16] : memref<1x1x8x16xf32, #tpu.memory_space<vmem>>, vector<1x1x8x16xf32>
    %20 = vector.shape_cast %19 : vector<1x1x8x16xf32> to vector<8x16xf32>
    %21 = vector.shape_cast %18 : vector<8x16xf32> to vector<1x1x8x16xf32>
    tpu.vector_store %arg5[%c0_13, %c0_14, %c0_15, %c0_16], %21 {strides = array<i32>} : memref<1x1x8x16xf32, #tpu.memory_space<vmem>>, vector<1x1x8x16xf32>,
    return
  }
  func.func @transform_0(%arg0: i32, %arg1: i32) -> (i32, i32, i32, i32) {
    %c0_i32 = arith.constant 0 : i32
    %c0_i32_0 = arith.constant 0 : i32
    %c0_i32_1 = arith.constant 0 : i32
    return %arg0, %arg1, %c0_i32, %c0_i32_0 : i32, i32, i32, i32
  }
  func.func @transform_1(%arg0: i32, %arg1: i32) -> (i32, i32, i32) {
    %c0_i32 = arith.constant 0 : i32
    %c0_i32_0 = arith.constant 0 : i32
    %c0_i32_1 = arith.constant 0 : i32
    return %arg0, %c0_i32, %c0_i32_0 : i32, i32, i32
  }
  func.func @transform_2(%arg0: i32, %arg1: i32) -> (i32, i32, i32) {
    %c0_i32 = arith.constant 0 : i32
    %c0_i32_0 = arith.constant 0 : i32
    %c0_i32_1 = arith.constant 0 : i32
    return %arg0, %c0_i32, %c0_i32_0 : i32, i32, i32
  }
  func.func @transform_3(%arg0: i32, %arg1: i32) -> (i32, i32, i32, i32) {
    %c0_i32 = arith.constant 0 : i32
    %c0_i32_0 = arith.constant 0 : i32
    %c0_i32_1 = arith.constant 0 : i32
    return %arg0, %arg1, %c0_i32, %c0_i32_0 : i32, i32, i32, i32
  }
}

module attributes {stable_mosaic.version = 11 : i64} {
  func.func @kernel(%arg0: i32, %arg1: i32, %arg2: i32, %arg3: memref<16x64xf32, #tpu.memory_space<vmem>>, %arg4: memref<64x32xf32, #tpu.memory_space<vmem>>, %arg5: memref<16x32xf32, #tpu.memory_space<vmem>>, %arg6: memref<16x32xf32, #tpu.memory_space<vmem>>) attributes {dimension_semantics = [#tpu.dimension_semantics<parallel>, #tpu.dimension_semantics<parallel>, #tpu.dimension_semantics<arbitrary>], iteration_bounds = array<i64: 1, 1, 1>, scalar_prefetch = 0 : i64, scratch_operands = 1 : i64, tpu.core_type = #tpu.core_type<tc>, window_params = [{transform_indices = @transform_0, window_bounds = array<i64: 16, 64>}, {transform_indices = @transform_1, window_bounds = array<i64: 64, 32>}, {transform_indices = @transform_2, window_bounds = array<i64: 16, 32>}]} {
    %c0_i32 = arith.constant 0 : i32
    %0 = arith.cmpi eq, %arg2, %c0_i32 : i32
    %1 = arith.extui %0 : i1 to i32
    %c0_i32_0 = arith.constant 0 : i32
    %2 = arith.cmpi ne, %1, %c0_i32_0 : i32
    scf.if %2 {
      %cst_10 = arith.constant 0.000000e+00 : f32
      %12 = vector.broadcast %cst_10 : f32 to vector<16x32xf32>
      %c0_11 = arith.constant 0 : index
      %c0_12 = arith.constant 0 : index
      %13 = vector.load %arg6[%c0_11, %c0_12] : memref<16x32xf32, #tpu.memory_space<vmem>>, vector<16x32xf32>
      tpu.vector_store %arg6[%c0_11, %c0_12], %12 {strides = array<i32>} : memref<16x32xf32, #tpu.memory_space<vmem>>, vector<16x32xf32>,
    } else {
    }
    %c0 = arith.constant 0 : index
    %c0_1 = arith.constant 0 : index
    %3 = vector.load %arg6[%c0, %c0_1] : memref<16x32xf32, #tpu.memory_space<vmem>>, vector<16x32xf32>
    %c0_2 = arith.constant 0 : index
    %c0_3 = arith.constant 0 : index
    %4 = vector.load %arg3[%c0_2, %c0_3] : memref<16x64xf32, #tpu.memory_space<vmem>>, vector<16x64xf32>
    %c0_4 = arith.constant 0 : index
    %c0_5 = arith.constant 0 : index
    %5 = vector.load %arg4[%c0_4, %c0_5] : memref<64x32xf32, #tpu.memory_space<vmem>>, vector<64x32xf32>
    %cst = arith.constant dense<0.000000e+00> : vector<16x32xf32>
    %6 = tpu.matmul %4, %5, %cst {dimension_numbers = #tpu.dot_dimension_numbers<[1], [0], [0], [1], [0, 0, 1, 1], [], []>} : vector<16x64xf32>, vector<64x32xf32>, vector<16x32xf32> -> vector<16x32xf32>
    %7 = arith.addf %3, %6 : vector<16x32xf32>
    %c0_6 = arith.constant 0 : index
    %c0_7 = arith.constant 0 : index
    %8 = vector.load %arg6[%c0_6, %c0_7] : memref<16x32xf32, #tpu.memory_space<vmem>>, vector<16x32xf32>
    tpu.vector_store %arg6[%c0_6, %c0_7], %7 {strides = array<i32>} : memref<16x32xf32, #tpu.memory_space<vmem>>, vector<16x32xf32>,
    %c0_i32_8 = arith.constant 0 : i32
    %9 = arith.cmpi eq, %arg2, %c0_i32_8 : i32
    %10 = arith.extui %9 : i1 to i32
    %c0_i32_9 = arith.constant 0 : i32
    %11 = arith.cmpi ne, %10, %c0_i32_9 : i32
    scf.if %11 {
      %c0_10 = arith.constant 0 : index
      %c0_11 = arith.constant 0 : index
      %12 = vector.load %arg6[%c0_10, %c0_11] : memref<16x32xf32, #tpu.memory_space<vmem>>, vector<16x32xf32>
      %c0_12 = arith.constant 0 : index
      %c0_13 = arith.constant 0 : index
      %13 = vector.load %arg5[%c0_12, %c0_13] : memref<16x32xf32, #tpu.memory_space<vmem>>, vector<16x32xf32>
      tpu.vector_store %arg5[%c0_12, %c0_13], %12 {strides = array<i32>} : memref<16x32xf32, #tpu.memory_space<vmem>>, vector<16x32xf32>,
    } else {
    }
    return
  }
  func.func @transform_0(%arg0: i32, %arg1: i32, %arg2: i32) -> (i32, i32) {
    %c0_i32 = arith.constant 0 : i32
    return %arg0, %arg2 : i32, i32
  }
  func.func @transform_1(%arg0: i32, %arg1: i32, %arg2: i32) -> (i32, i32) {
    %c0_i32 = arith.constant 0 : i32
    return %arg2, %arg1 : i32, i32
  }
  func.func @transform_2(%arg0: i32, %arg1: i32, %arg2: i32) -> (i32, i32) {
    %c0_i32 = arith.constant 0 : i32
    return %arg0, %arg1 : i32, i32
  }
}

module attributes {stable_mosaic.version = 11 : i64} {
  func.func @kernel(%arg0: i32, %arg1: i32, %arg2: i32, %arg3: memref<16x32xf32, #tpu.memory_space<vmem>>, %arg4: memref<32x128xf32, #tpu.memory_space<vmem>>, %arg5: memref<1x128xf32, #tpu.memory_space<vmem>>, %arg6: memref<16x128xf32, #tpu.memory_space<vmem>>, %arg7: memref<16x128xf32, #tpu.memory_space<vmem>>) attributes {dimension_semantics = [#tpu.dimension_semantics<parallel>, #tpu.dimension_semantics<parallel>, #tpu.dimension_semantics<arbitrary>], iteration_bounds = array<i64: 1, 1, 1>, scalar_prefetch = 0 : i64, scratch_operands = 1 : i64, tpu.core_type = #tpu.core_type<tc>, window_params = [{transform_indices = @transform_0, window_bounds = array<i64: 16, 32>}, {transform_indices = @transform_1, window_bounds = array<i64: 32, 128>}, {transform_indices = @transform_2, window_bounds = array<i64: 1, 128>}, {transform_indices = @transform_3, window_bounds = array<i64: 16, 128>}]} {
    %c0_i32 = arith.constant 0 : i32
    %0 = arith.cmpi eq, %arg2, %c0_i32 : i32
    %1 = arith.extui %0 : i1 to i32
    %c0_i32_0 = arith.constant 0 : i32
    %2 = arith.cmpi ne, %1, %c0_i32_0 : i32
    scf.if %2 {
      %cst_10 = arith.constant 0.000000e+00 : f32
      %12 = vector.broadcast %cst_10 : f32 to vector<16x128xf32>
      %c0_11 = arith.constant 0 : index
      %c0_12 = arith.constant 0 : index
      %13 = vector.load %arg7[%c0_11, %c0_12] : memref<16x128xf32, #tpu.memory_space<vmem>>, vector<16x128xf32>
      tpu.vector_store %arg7[%c0_11, %c0_12], %12 {strides = array<i32>} : memref<16x128xf32, #tpu.memory_space<vmem>>, vector<16x128xf32>,
    } else {
    }
    %c0 = arith.constant 0 : index
    %c0_1 = arith.constant 0 : index
    %3 = vector.load %arg7[%c0, %c0_1] : memref<16x128xf32, #tpu.memory_space<vmem>>, vector<16x128xf32>
    %c0_2 = arith.constant 0 : index
    %c0_3 = arith.constant 0 : index
    %4 = vector.load %arg3[%c0_2, %c0_3] : memref<16x32xf32, #tpu.memory_space<vmem>>, vector<16x32xf32>
    %c0_4 = arith.constant 0 : index
    %c0_5 = arith.constant 0 : index
    %5 = vector.load %arg4[%c0_4, %c0_5] : memref<32x128xf32, #tpu.memory_space<vmem>>, vector<32x128xf32>
    %cst = arith.constant dense<0.000000e+00> : vector<16x128xf32>
    %6 = tpu.matmul %4, %5, %cst {dimension_numbers = #tpu.dot_dimension_numbers<[1], [0], [0], [1], [0, 0, 1, 1], [], []>} : vector<16x32xf32>, vector<32x128xf32>, vector<16x128xf32> -> vector<16x128xf32>
    %7 = arith.addf %3, %6 : vector<16x128xf32>
    %c0_6 = arith.constant 0 : index
    %c0_7 = arith.constant 0 : index
    %8 = vector.load %arg7[%c0_6, %c0_7] : memref<16x128xf32, #tpu.memory_space<vmem>>, vector<16x128xf32>
    tpu.vector_store %arg7[%c0_6, %c0_7], %7 {strides = array<i32>} : memref<16x128xf32, #tpu.memory_space<vmem>>, vector<16x128xf32>,
    %c0_i32_8 = arith.constant 0 : i32
    %9 = arith.cmpi eq, %arg2, %c0_i32_8 : i32
    %10 = arith.extui %9 : i1 to i32
    %c0_i32_9 = arith.constant 0 : i32
    %11 = arith.cmpi ne, %10, %c0_i32_9 : i32
    scf.if %11 {
      %c0_10 = arith.constant 0 : index
      %c0_11 = arith.constant 0 : index
      %12 = vector.load %arg7[%c0_10, %c0_11] : memref<16x128xf32, #tpu.memory_space<vmem>>, vector<16x128xf32>
      %c0_12 = arith.constant 0 : index
      %c0_13 = arith.constant 0 : index
      %13 = vector.load %arg5[%c0_12, %c0_13] : memref<1x128xf32, #tpu.memory_space<vmem>>, vector<1x128xf32>
      %14 = vector.broadcast %13 : vector<1x128xf32> to vector<16x128xf32>
      %15 = arith.addf %12, %14 : vector<16x128xf32>
      %cst_14 = arith.constant 5.000000e-01 : f32
      %16 = vector.broadcast %cst_14 : f32 to vector<16x128xf32>
      %17 = arith.mulf %16, %15 : vector<16x128xf32>
      %cst_15 = arith.constant 4.471500e-02 : f32
      %18 = vector.broadcast %cst_15 : f32 to vector<16x128xf32>
      %19 = arith.mulf %18, %15 : vector<16x128xf32>
      %20 = arith.mulf %19, %15 : vector<16x128xf32>
      %21 = arith.mulf %20, %15 : vector<16x128xf32>
      %22 = arith.addf %15, %21 : vector<16x128xf32>
      %cst_16 = arith.constant 0.797884583 : f32
      %23 = vector.broadcast %cst_16 : f32 to vector<16x128xf32>
      %24 = arith.mulf %23, %22 : vector<16x128xf32>
      %25 = math.tanh %24 : vector<16x128xf32>
      %cst_17 = arith.constant 1.000000e+00 : f32
      %26 = vector.broadcast %cst_17 : f32 to vector<16x128xf32>
      %27 = arith.addf %26, %25 : vector<16x128xf32>
      %28 = arith.mulf %17, %27 : vector<16x128xf32>
      %c0_18 = arith.constant 0 : index
      %c0_19 = arith.constant 0 : index
      %29 = vector.load %arg6[%c0_18, %c0_19] : memref<16x128xf32, #tpu.memory_space<vmem>>, vector<16x128xf32>
      tpu.vector_store %arg6[%c0_18, %c0_19], %28 {strides = array<i32>} : memref<16x128xf32, #tpu.memory_space<vmem>>, vector<16x128xf32>,
    } else {
    }
    return
  }
  func.func @transform_0(%arg0: i32, %arg1: i32, %arg2: i32) -> (i32, i32) {
    %c0_i32 = arith.constant 0 : i32
    return %arg0, %arg2 : i32, i32
  }
  func.func @transform_1(%arg0: i32, %arg1: i32, %arg2: i32) -> (i32, i32) {
    %c0_i32 = arith.constant 0 : i32
    return %arg2, %arg1 : i32, i32
  }
  func.func @transform_2(%arg0: i32, %arg1: i32, %arg2: i32) -> (i32, i32) {
    %c0_i32 = arith.constant 0 : i32
    %c0_i32_0 = arith.constant 0 : i32
    return %c0_i32, %arg1 : i32, i32
  }
  func.func @transform_3(%arg0: i32, %arg1: i32, %arg2: i32) -> (i32, i32) {
    %c0_i32 = arith.constant 0 : i32
    return %arg0, %arg1 : i32, i32
  }
}

module attributes {stable_mosaic.version = 11 : i64} {
  func.func @kernel(%arg0: i32, %arg1: i32, %arg2: i32, %arg3: memref<16x128xf32, #tpu.memory_space<vmem>>, %arg4: memref<128x32xf32, #tpu.memory_space<vmem>>, %arg5: memref<1x32xf32, #tpu.memory_space<vmem>>, %arg6: memref<16x32xf32, #tpu.memory_space<vmem>>, %arg7: memref<16x32xf32, #tpu.memory_space<vmem>>) attributes {dimension_semantics = [#tpu.dimension_semantics<parallel>, #tpu.dimension_semantics<parallel>, #tpu.dimension_semantics<arbitrary>], iteration_bounds = array<i64: 1, 1, 1>, scalar_prefetch = 0 : i64, scratch_operands = 1 : i64, tpu.core_type = #tpu.core_type<tc>, window_params = [{transform_indices = @transform_0, window_bounds = array<i64: 16, 128>}, {transform_indices = @transform_1, window_bounds = array<i64: 128, 32>}, {transform_indices = @transform_2, window_bounds = array<i64: 1, 32>}, {transform_indices = @transform_3, window_bounds = array<i64: 16, 32>}]} {
    %c0_i32 = arith.constant 0 : i32
    %0 = arith.cmpi eq, %arg2, %c0_i32 : i32
    %1 = arith.extui %0 : i1 to i32
    %c0_i32_0 = arith.constant 0 : i32
    %2 = arith.cmpi ne, %1, %c0_i32_0 : i32
    scf.if %2 {
      %cst_10 = arith.constant 0.000000e+00 : f32
      %12 = vector.broadcast %cst_10 : f32 to vector<16x32xf32>
      %c0_11 = arith.constant 0 : index
      %c0_12 = arith.constant 0 : index
      %13 = vector.load %arg7[%c0_11, %c0_12] : memref<16x32xf32, #tpu.memory_space<vmem>>, vector<16x32xf32>
      tpu.vector_store %arg7[%c0_11, %c0_12], %12 {strides = array<i32>} : memref<16x32xf32, #tpu.memory_space<vmem>>, vector<16x32xf32>,
    } else {
    }
    %c0 = arith.constant 0 : index
    %c0_1 = arith.constant 0 : index
    %3 = vector.load %arg7[%c0, %c0_1] : memref<16x32xf32, #tpu.memory_space<vmem>>, vector<16x32xf32>
    %c0_2 = arith.constant 0 : index
    %c0_3 = arith.constant 0 : index
    %4 = vector.load %arg3[%c0_2, %c0_3] : memref<16x128xf32, #tpu.memory_space<vmem>>, vector<16x128xf32>
    %c0_4 = arith.constant 0 : index
    %c0_5 = arith.constant 0 : index
    %5 = vector.load %arg4[%c0_4, %c0_5] : memref<128x32xf32, #tpu.memory_space<vmem>>, vector<128x32xf32>
    %cst = arith.constant dense<0.000000e+00> : vector<16x32xf32>
    %6 = tpu.matmul %4, %5, %cst {dimension_numbers = #tpu.dot_dimension_numbers<[1], [0], [0], [1], [0, 0, 1, 1], [], []>} : vector<16x128xf32>, vector<128x32xf32>, vector<16x32xf32> -> vector<16x32xf32>
    %7 = arith.addf %3, %6 : vector<16x32xf32>
    %c0_6 = arith.constant 0 : index
    %c0_7 = arith.constant 0 : index
    %8 = vector.load %arg7[%c0_6, %c0_7] : memref<16x32xf32, #tpu.memory_space<vmem>>, vector<16x32xf32>
    tpu.vector_store %arg7[%c0_6, %c0_7], %7 {strides = array<i32>} : memref<16x32xf32, #tpu.memory_space<vmem>>, vector<16x32xf32>,
    %c0_i32_8 = arith.constant 0 : i32
    %9 = arith.cmpi eq, %arg2, %c0_i32_8 : i32
    %10 = arith.extui %9 : i1 to i32
    %c0_i32_9 = arith.constant 0 : i32
    %11 = arith.cmpi ne, %10, %c0_i32_9 : i32
    scf.if %11 {
      %c0_10 = arith.constant 0 : index
      %c0_11 = arith.constant 0 : index
      %12 = vector.load %arg7[%c0_10, %c0_11] : memref<16x32xf32, #tpu.memory_space<vmem>>, vector<16x32xf32>
      %c0_12 = arith.constant 0 : index
      %c0_13 = arith.constant 0 : index
      %13 = vector.load %arg5[%c0_12, %c0_13] : memref<1x32xf32, #tpu.memory_space<vmem>>, vector<1x32xf32>
      %14 = vector.broadcast %13 : vector<1x32xf32> to vector<16x32xf32>
      %15 = arith.addf %12, %14 : vector<16x32xf32>
      %c0_14 = arith.constant 0 : index
      %c0_15 = arith.constant 0 : index
      %16 = vector.load %arg6[%c0_14, %c0_15] : memref<16x32xf32, #tpu.memory_space<vmem>>, vector<16x32xf32>
      tpu.vector_store %arg6[%c0_14, %c0_15], %15 {strides = array<i32>} : memref<16x32xf32, #tpu.memory_space<vmem>>, vector<16x32xf32>,
    } else {
    }
    return
  }
  func.func @transform_0(%arg0: i32, %arg1: i32, %arg2: i32) -> (i32, i32) {
    %c0_i32 = arith.constant 0 : i32
    return %arg0, %arg2 : i32, i32
  }
  func.func @transform_1(%arg0: i32, %arg1: i32, %arg2: i32) -> (i32, i32) {
    %c0_i32 = arith.constant 0 : i32
    return %arg2, %arg1 : i32, i32
  }
  func.func @transform_2(%arg0: i32, %arg1: i32, %arg2: i32) -> (i32, i32) {
    %c0_i32 = arith.constant 0 : i32
    %c0_i32_0 = arith.constant 0 : i32
    return %c0_i32, %arg1 : i32, i32
  }
  func.func @transform_3(%arg0: i32, %arg1: i32, %arg2: i32) -> (i32, i32) {
    %c0_i32 = arith.constant 0 : i32
    return %arg0, %arg1 : i32, i32
  }
}

</mosaic_0001>

<llo_original>
// kernel: transformer_forward.18
$region0: #{transformer_forward.18}
  #allocation0 [shape = 'u32[]', space=smem, size = 0x4, offset = 0x4, fixed_abs, tag = 'smem constant byte address 0x4 - core index']
  #allocation1 [shape = 'u32[144,128]{1,0:T(1,128)}', space=vmem, size = 0x12000, scoped, tag = 'internal scratch']
  #allocation2 [shape = 'f32[16,32]{1,0:T(8,128)}', space=vmem, size = 0x2000, scoped, tag = 'scratch operand']
  %s0 = inlined_call_operand.vmem [shape: f32[16,32], index: 0, kind: input, shape index: {}]
  %s1 = inlined_call_operand.vmem [shape: f32[32,32], index: 1, kind: input, shape index: {}]
  %s2 = inlined_call_operand.vmem [shape: f32[16,32], index: 2, kind: output, shape index: {}]
  %s3 = sld [smem:[#allocation0]]
  $region26: #{transformer_forward.18} parent=0
    _
  %s5 = ssub.s32 1, %s3
  %s6 = scalar_select 0, %s5, %s3
  // Predicated region
  $region2: #{transformer_forward.18} parent=0 // pred_check
    _
  $region3: #{transformer_forward.18} parent=0 // pred_check_branch
    %8 = sbr.rel (0) target = $region5
  $region4: #{transformer_forward.18} parent=0 // pred_region
    _
  $region5: #{transformer_forward.18} parent=0 // pred_fallthru
    _
  // Predicated region
  $region6: #{transformer_forward.18} parent=0 // pred_check
    _
  $region7: #{transformer_forward.18} parent=0 // pred_check_branch
    %10 = sbr.rel (0) target = $region9
  $region8: #{transformer_forward.18} parent=0 // pred_region
    _
  $region9: #{transformer_forward.18} parent=0 // pred_fallthru
    _
  %p11 = scmp.eq.s32.totalorder 0, 0
  // Predicated region
  $region10: #{transformer_forward.18} parent=0 // pred_check
    %p12 = pneg %p11
  $region11: #{transformer_forward.18} parent=0 // pred_check_branch
    %14 = sbr.rel (%p12) target = $region13
  $region12: #{transformer_forward.18} parent=0 // pred_region
    %vm15 = vcmask 261120
    %16 = vst.msk [vmem:[#allocation2] sm:$0xff] %vm15, 0.0
    %17 = vst.msk [vmem:[#allocation2 + $0x8] sm:$0xff] %vm15, 0.0
  $region13: #{transformer_forward.18} parent=0 // pred_fallthru
    _
  %v18 = vld [vmem:[#allocation2] sm:$0xff]
  %v19 = vld [vmem:[#allocation2 + $0x8] sm:$0xff]
  %v20 = vld [vmem:[%s0] sm:$0xff]
  %v21 = vld [vmem:[%s0 + $0x8] sm:$0xff]
  %v22 = vld [vmem:[%s1] sm:$0xff]
  %v23 = vld [vmem:[%s1 + $0x8] sm:$0xff]
  %v24 = vld [vmem:[%s1 + $0x10] sm:$0xff]
  %v25 = vld [vmem:[%s1 + $0x18] sm:$0xff]
  %vm26 = vcmask 261120
  %v28 = vsel %vm26, %v20, 0
  %v31 = vsel %vm26, %v21, 0
  %33 = vmatprep.subr.mxu0 0.0
  %34 = vmatpush1.msra.mxu0 %v22
  %35 = vmatprep.subr.mxu0 0.0
  %36 = vmatpush1.msra.mxu0 %v23
  %37 = vmatprep.subr.mxu0 0.0
  %38 = vmatpush1.msra.mxu0 %v24
  %39 = vmatprep.subr.mxu0 0.0
  %40 = vmatpush1.msra.mxu0 %v25
  %41 = vmatprep.subr.mxu0 0.0
  %42 = vmatpush1.msra.mxu0 0.0
  %43 = vmatprep.subr.mxu0 0.0
  %44 = vmatpush1.msra.mxu0 0.0
  %45 = vmatprep.subr.mxu0 0.0
  %46 = vmatpush1.msra.mxu0 0.0
  %47 = vmatprep.subr.mxu0 0.0
  %48 = vmatpush1.msra.mxu0 0.0
  %49 = vmatprep.subr.mxu0 0.0
  %50 = vmatpush1.msra.mxu0 0.0
  %51 = vmatprep.subr.mxu0 0.0
  %52 = vmatpush1.msra.mxu0 0.0
  %53 = vmatprep.subr.mxu0 0.0
  %54 = vmatpush1.msra.mxu0 0.0
  %55 = vmatprep.subr.mxu0 0.0
  %56 = vmatpush1.msra.mxu0 0.0
  %57 = vmatprep.subr.mxu0 0.0
  %58 = vmatpush1.msra.mxu0 0.0
  %59 = vmatprep.subr.mxu0 0.0
  %60 = vmatpush1.msra.mxu0 0.0
  %61 = vmatprep.subr.mxu0 0.0
  %62 = vmatpush1.msra.mxu0 0.0
  %63 = vmatprep.subr.mxu0 0.0
  %64 = vmatpush1.msra.mxu0 0.0
  %65 = vmatprep.subr.mxu0 0.0
  %66 = vmatpush1.msra.mxu0 0.0
  %67 = vmatprep.subr.mxu0 0.0
  %68 = vmatpush1.msra.mxu0 0.0
  %69 = vmatprep.subr.mxu0 0.0
  %70 = vmatpush1.msra.mxu0 0.0
  %71 = vmatprep.subr.mxu0 0.0
  %72 = vmatpush1.msra.mxu0 0.0
  %73 = vmatprep.subr.mxu0 0.0
  %74 = vmatpush1.msra.mxu0 0.0
  %75 = vmatprep.subr.mxu0 0.0
  %76 = vmatpush1.msra.mxu0 0.0
  %77 = vmatprep.subr.mxu0 0.0
  %78 = vmatpush1.msra.mxu0 0.0
  %79 = vmatprep.subr.mxu0 0.0
  %80 = vmatpush1.msra.mxu0 0.0
  %81 = vmatprep.subr.mxu0 0.0
  %82 = vmatpush1.msra.mxu0 0.0
  %83 = vmatprep.subr.mxu0 0.0
  %84 = vmatpush1.msra.mxu0 0.0
  %85 = vmatprep.subr.mxu0 0.0
  %86 = vmatpush1.msra.mxu0 0.0
  %87 = vmatprep.subr.mxu0 0.0
  %88 = vmatpush1.msra.mxu0 0.0
  %89 = vmatprep.subr.mxu0 0.0
  %90 = vmatpush1.msra.mxu0 0.0
  %91 = vmatprep.subr.mxu0 0.0
  %92 = vmatpush1.msra.mxu0 0.0
  %93 = vmatprep.subr.mxu0 0.0
  %94 = vmatpush1.msra.mxu0 0.0
  %95 = vmatprep.subr.mxu0 0.0
  %96 = vmatpush1.msra.mxu0 0.0
  %97 = vmatprep.mubr.f32.mxu0 0.0
  %98 = vmatmul.mubr.f32.gmra.mrb[0].mxu0 %v28
  %v99 = vpop.f32.mrb[0].mxu0
  %v100 = vadd.f32 0.0, %v99
  %v101 = vpop.f32.mrb[0].mxu0
  %102 = vmatprep.mubr.f32.mxu0 0.0
  %103 = vmatmul.mubr.f32.gmra.mrb[0].mxu0 %v31
  %v104 = vpop.f32.mrb[0].mxu0
  %v105 = vadd.f32 0.0, %v104
  %v106 = vpop.f32.mrb[0].mxu0
  %107 = vdwg.mxu0
  %v108 = vadd.f32 %v18, %v100
  %v109 = vadd.f32 %v19, %v105
  %110 = vst.msk [vmem:[#allocation2] sm:$0xff] %vm26, %v108
  %111 = vst.msk [vmem:[#allocation2 + $0x8] sm:$0xff] %vm26, %v109
  // Predicated region
  $region14: #{transformer_forward.18} parent=0 // pred_check
    %p112 = pneg %p11
  $region15: #{transformer_forward.18} parent=0 // pred_check_branch
    %114 = sbr.rel (%p112) target = $region17
  $region16: #{transformer_forward.18} parent=0 // pred_region
    %v115 = vld [vmem:[#allocation2] sm:$0xff]
    %v116 = vld [vmem:[#allocation2 + $0x8] sm:$0xff]
    %117 = vst.msk [vmem:[%s2] sm:$0xff] %vm26, %v115
    %118 = vst.msk [vmem:[%s2 + $0x8] sm:$0xff] %vm26, %v116
  $region17: #{transformer_forward.18} parent=0 // pred_fallthru
    _
  // Predicated region
  $region18: #{transformer_forward.18} parent=0 // pred_check
    _
  $region19: #{transformer_forward.18} parent=0 // pred_check_branch
    %120 = sbr.rel (0) target = $region21
  $region20: #{transformer_forward.18} parent=0 // pred_region
    _
  $region21: #{transformer_forward.18} parent=0 // pred_fallthru
    _
  // Predicated region
  $region22: #{transformer_forward.18} parent=0 // pred_check
    _
  $region23: #{transformer_forward.18} parent=0 // pred_check_branch
    %122 = sbr.rel (0) target = $region25
  $region24: #{transformer_forward.18} parent=0 // pred_region
    _
  $region25: #{transformer_forward.18} parent=0 // pred_fallthru
    _

// kernel: transformer_forward.17
$region0: #{transformer_forward.17}
  #allocation0 [shape = 'u32[]', space=smem, size = 0x4, offset = 0x4, fixed_abs, tag = 'smem constant byte address 0x4 - core index']
  #allocation1 [shape = 'u32[144,128]{1,0:T(1,128)}', space=vmem, size = 0x12000, scoped, tag = 'internal scratch']
  #allocation2 [shape = 'f32[16,64]{1,0:T(8,128)}', space=vmem, size = 0x2000, scoped, tag = 'scratch operand']
  %s0 = inlined_call_operand.vmem [shape: f32[16,32], index: 0, kind: input, shape index: {}]
  %s1 = inlined_call_operand.vmem [shape: f32[32,64], index: 1, kind: input, shape index: {}]
  %s2 = inlined_call_operand.vmem [shape: f32[16,64], index: 2, kind: output, shape index: {}]
  %s3 = sld [smem:[#allocation0]]
  $region26: #{transformer_forward.17} parent=0
    _
  %s5 = ssub.s32 1, %s3
  %s6 = scalar_select 0, %s5, %s3
  // Predicated region
  $region2: #{transformer_forward.17} parent=0 // pred_check
    _
  $region3: #{transformer_forward.17} parent=0 // pred_check_branch
    %8 = sbr.rel (0) target = $region5
  $region4: #{transformer_forward.17} parent=0 // pred_region
    _
  $region5: #{transformer_forward.17} parent=0 // pred_fallthru
    _
  // Predicated region
  $region6: #{transformer_forward.17} parent=0 // pred_check
    _
  $region7: #{transformer_forward.17} parent=0 // pred_check_branch
    %10 = sbr.rel (0) target = $region9
  $region8: #{transformer_forward.17} parent=0 // pred_region
    _
  $region9: #{transformer_forward.17} parent=0 // pred_fallthru
    _
  %p11 = scmp.eq.s32.totalorder 0, 0
  // Predicated region
  $region10: #{transformer_forward.17} parent=0 // pred_check
    %p12 = pneg %p11
  $region11: #{transformer_forward.17} parent=0 // pred_check_branch
    %14 = sbr.rel (%p12) target = $region13
  $region12: #{transformer_forward.17} parent=0 // pred_region
    %vm15 = vcmask 523264
    %16 = vst.msk [vmem:[#allocation2] sm:$0xff] %vm15, 0.0
    %17 = vst.msk [vmem:[#allocation2 + $0x8] sm:$0xff] %vm15, 0.0
  $region13: #{transformer_forward.17} parent=0 // pred_fallthru
    _
  %v18 = vld [vmem:[#allocation2] sm:$0xff]
  %v19 = vld [vmem:[#allocation2 + $0x8] sm:$0xff]
  %v20 = vld [vmem:[%s0] sm:$0xff]
  %v21 = vld [vmem:[%s0 + $0x8] sm:$0xff]
  %v22 = vld [vmem:[%s1] sm:$0xff]
  %v23 = vld [vmem:[%s1 + $0x8] sm:$0xff]
  %v24 = vld [vmem:[%s1 + $0x10] sm:$0xff]
  %v25 = vld [vmem:[%s1 + $0x18] sm:$0xff]
  %vm26 = vcmask 261120
  %v28 = vsel %vm26, %v20, 0
  %v31 = vsel %vm26, %v21, 0
  %33 = vmatprep.subr.mxu0 0.0
  %34 = vmatpush1.msra.mxu0 %v22
  %35 = vmatprep.subr.mxu0 0.0
  %36 = vmatpush1.msra.mxu0 %v23
  %37 = vmatprep.subr.mxu0 0.0
  %38 = vmatpush1.msra.mxu0 %v24
  %39 = vmatprep.subr.mxu0 0.0
  %40 = vmatpush1.msra.mxu0 %v25
  %41 = vmatprep.subr.mxu0 0.0
  %42 = vmatpush1.msra.mxu0 0.0
  %43 = vmatprep.subr.mxu0 0.0
  %44 = vmatpush1.msra.mxu0 0.0
  %45 = vmatprep.subr.mxu0 0.0
  %46 = vmatpush1.msra.mxu0 0.0
  %47 = vmatprep.subr.mxu0 0.0
  %48 = vmatpush1.msra.mxu0 0.0
  %49 = vmatprep.subr.mxu0 0.0
  %50 = vmatpush1.msra.mxu0 0.0
  %51 = vmatprep.subr.mxu0 0.0
  %52 = vmatpush1.msra.mxu0 0.0
  %53 = vmatprep.subr.mxu0 0.0
  %54 = vmatpush1.msra.mxu0 0.0
  %55 = vmatprep.subr.mxu0 0.0
  %56 = vmatpush1.msra.mxu0 0.0
  %57 = vmatprep.subr.mxu0 0.0
  %58 = vmatpush1.msra.mxu0 0.0
  %59 = vmatprep.subr.mxu0 0.0
  %60 = vmatpush1.msra.mxu0 0.0
  %61 = vmatprep.subr.mxu0 0.0
  %62 = vmatpush1.msra.mxu0 0.0
  %63 = vmatprep.subr.mxu0 0.0
  %64 = vmatpush1.msra.mxu0 0.0
  %65 = vmatprep.subr.mxu0 0.0
  %66 = vmatpush1.msra.mxu0 0.0
  %67 = vmatprep.subr.mxu0 0.0
  %68 = vmatpush1.msra.mxu0 0.0
  %69 = vmatprep.subr.mxu0 0.0
  %70 = vmatpush1.msra.mxu0 0.0
  %71 = vmatprep.subr.mxu0 0.0
  %72 = vmatpush1.msra.mxu0 0.0
  %73 = vmatprep.subr.mxu0 0.0
  %74 = vmatpush1.msra.mxu0 0.0
  %75 = vmatprep.subr.mxu0 0.0
  %76 = vmatpush1.msra.mxu0 0.0
  %77 = vmatprep.subr.mxu0 0.0
  %78 = vmatpush1.msra.mxu0 0.0
  %79 = vmatprep.subr.mxu0 0.0
  %80 = vmatpush1.msra.mxu0 0.0
  %81 = vmatprep.subr.mxu0 0.0
  %82 = vmatpush1.msra.mxu0 0.0
  %83 = vmatprep.subr.mxu0 0.0
  %84 = vmatpush1.msra.mxu0 0.0
  %85 = vmatprep.subr.mxu0 0.0
  %86 = vmatpush1.msra.mxu0 0.0
  %87 = vmatprep.subr.mxu0 0.0
  %88 = vmatpush1.msra.mxu0 0.0
  %89 = vmatprep.subr.mxu0 0.0
  %90 = vmatpush1.msra.mxu0 0.0
  %91 = vmatprep.subr.mxu0 0.0
  %92 = vmatpush1.msra.mxu0 0.0
  %93 = vmatprep.subr.mxu0 0.0
  %94 = vmatpush1.msra.mxu0 0.0
  %95 = vmatprep.subr.mxu0 0.0
  %96 = vmatpush1.msra.mxu0 0.0
  %97 = vmatprep.mubr.f32.mxu0 0.0
  %98 = vmatmul.mubr.f32.gmra.mrb[0].mxu0 %v28
  %v99 = vpop.f32.mrb[0].mxu0
  %v100 = vadd.f32 0.0, %v99
  %v101 = vpop.f32.mrb[0].mxu0
  %102 = vmatprep.mubr.f32.mxu0 0.0
  %103 = vmatmul.mubr.f32.gmra.mrb[0].mxu0 %v31
  %v104 = vpop.f32.mrb[0].mxu0
  %v105 = vadd.f32 0.0, %v104
  %v106 = vpop.f32.mrb[0].mxu0
  %107 = vdwg.mxu0
  %v108 = vadd.f32 %v18, %v100
  %v109 = vadd.f32 %v19, %v105
  %vm110 = vcmask 523264
  %111 = vst.msk [vmem:[#allocation2] sm:$0xff] %vm110, %v108
  %112 = vst.msk [vmem:[#allocation2 + $0x8] sm:$0xff] %vm110, %v109
  // Predicated region
  $region14: #{transformer_forward.17} parent=0 // pred_check
    %p113 = pneg %p11
  $region15: #{transformer_forward.17} parent=0 // pred_check_branch
    %115 = sbr.rel (%p113) target = $region17
  $region16: #{transformer_forward.17} parent=0 // pred_region
    %v116 = vld [vmem:[#allocation2] sm:$0xff]
    %v117 = vld [vmem:[#allocation2 + $0x8] sm:$0xff]
    %118 = vst.msk [vmem:[%s2] sm:$0xff] %vm110, %v116
    %119 = vst.msk [vmem:[%s2 + $0x8] sm:$0xff] %vm110, %v117
  $region17: #{transformer_forward.17} parent=0 // pred_fallthru
    _
  // Predicated region
  $region18: #{transformer_forward.17} parent=0 // pred_check
    _
  $region19: #{transformer_forward.17} parent=0 // pred_check_branch
    %121 = sbr.rel (0) target = $region21
  $region20: #{transformer_forward.17} parent=0 // pred_region
    _
  $region21: #{transformer_forward.17} parent=0 // pred_fallthru
    _
  // Predicated region
  $region22: #{transformer_forward.17} parent=0 // pred_check
    _
  $region23: #{transformer_forward.17} parent=0 // pred_check_branch
    %123 = sbr.rel (0) target = $region25
  $region24: #{transformer_forward.17} parent=0 // pred_region
    _
  $region25: #{transformer_forward.17} parent=0 // pred_fallthru
    _

// kernel: transformer_forward.16
$region0: #{transformer_forward.16}
  #allocation0 [shape = 'u32[]', space=smem, size = 0x4, offset = 0x4, fixed_abs, tag = 'smem constant byte address 0x4 - core index']
  #allocation1 [shape = 'u32[144,128]{1,0:T(1,128)}', space=vmem, size = 0x12000, scoped, tag = 'internal scratch']
  %s0 = inlined_call_operand.vmem [shape: f32[16,32], index: 0, kind: input, shape index: {}]
  %s1 = inlined_call_operand.vmem [shape: f32[1,32], index: 1, kind: input, shape index: {}]
  %s2 = inlined_call_operand.vmem [shape: f32[1,32], index: 2, kind: input, shape index: {}]
  %s3 = inlined_call_operand.vmem [shape: f32[16,32], index: 3, kind: output, shape index: {}]
  %s4 = sld [smem:[#allocation0]]
  $region22: #{transformer_forward.16} parent=0
    _
  %s6 = ssub.s32 1, %s4
  %s7 = scalar_select 0, %s6, %s4
  // Predicated region
  $region2: #{transformer_forward.16} parent=0 // pred_check
    _
  $region3: #{transformer_forward.16} parent=0 // pred_check_branch
    %9 = sbr.rel (0) target = $region5
  $region4: #{transformer_forward.16} parent=0 // pred_region
    _
  $region5: #{transformer_forward.16} parent=0 // pred_fallthru
    _
  // Predicated region
  $region6: #{transformer_forward.16} parent=0 // pred_check
    _
  $region7: #{transformer_forward.16} parent=0 // pred_check_branch
    %11 = sbr.rel (0) target = $region9
  $region8: #{transformer_forward.16} parent=0 // pred_region
    _
  $region9: #{transformer_forward.16} parent=0 // pred_fallthru
    _
  // Predicated region
  $region10: #{transformer_forward.16} parent=0 // pred_check
    _
  $region11: #{transformer_forward.16} parent=0 // pred_check_branch
    %13 = sbr.rel (0) target = $region13
  $region12: #{transformer_forward.16} parent=0 // pred_region
    _
  $region13: #{transformer_forward.16} parent=0 // pred_fallthru
    _
  %v14 = vld [vmem:[%s0] sm:$0xff]
  %v15 = vld [vmem:[%s0 + $0x8] sm:$0xff]
  %vm16 = vcmask 261120
  %v17 = vsel %vm16, %v14, 0.0
  %18 = vadd.xlane.f32.xlu0 %v17
  %v19 = vpop.xlane.xlu0 %18
  %v20 = vsel %vm16, %v15, 0.0
  %21 = vadd.xlane.f32.xlu0 %v20
  %v22 = vpop.xlane.xlu0 %21
  %v23 = vrcp.pop 32.0
  %v24 = vmul.f32 %v19, %v23
  %v25 = vmul.f32 %v22, %v23
  %v26 = vsub.f32 %v14, %v24
  %v27 = vsub.f32 %v15, %v25
  %v28 = vmul.f32 %v26, %v26
  %v29 = vmul.f32 %v27, %v27
  %v30 = vsel %vm16, %v28, 0.0
  %31 = vadd.xlane.f32.xlu0 %v30
  %v32 = vpop.xlane.xlu0 %31
  %v33 = vsel %vm16, %v29, 0.0
  %34 = vadd.xlane.f32.xlu0 %v33
  %v35 = vpop.xlane.xlu0 %34
  %v36 = vmul.f32 %v32, %v23
  %v37 = vmul.f32 %v35, %v23
  %v38 = vadd.f32 %v36, 1e-05
  %v39 = vadd.f32 %v37, 1e-05
  %v40 = vrsqrt.pop %v38
  %v41 = vrsqrt.pop %v39
  %v42 = vld [vmem:[%s1] sm:$0x1]
  %v43 = vld [vmem:[%s2] sm:$0x1]
  %v44 = vmul.f32 %v26, %v40
  %v45 = vmul.f32 %v27, %v41
  %v47 = vlaneseq
  %v48 = vshrl.u32 %v47, 7
  %v49 = vsub.s32 0, %v48
  %v50 = vrot.slane %v42, %v49
  %v52 = vmul.f32 %v44, %v50
  %v53 = vmul.f32 %v45, %v50
  %v55 = vlaneseq
  %v56 = vshrl.u32 %v55, 7
  %v57 = vsub.s32 0, %v56
  %v58 = vrot.slane %v43, %v57
  %v60 = vadd.f32 %v52, %v58
  %v61 = vadd.f32 %v53, %v58
  %62 = vst.msk [vmem:[%s3] sm:$0xff] %vm16, %v60
  %63 = vst.msk [vmem:[%s3 + $0x8] sm:$0xff] %vm16, %v61
  // Predicated region
  $region14: #{transformer_forward.16} parent=0 // pred_check
    _
  $region15: #{transformer_forward.16} parent=0 // pred_check_branch
    %65 = sbr.rel (0) target = $region17
  $region16: #{transformer_forward.16} parent=0 // pred_region
    _
  $region17: #{transformer_forward.16} parent=0 // pred_fallthru
    _
  // Predicated region
  $region18: #{transformer_forward.16} parent=0 // pred_check
    _
  $region19: #{transformer_forward.16} parent=0 // pred_check_branch
    %67 = sbr.rel (0) target = $region21
  $region20: #{transformer_forward.16} parent=0 // pred_region
    _
  $region21: #{transformer_forward.16} parent=0 // pred_fallthru
    _

// kernel: transformer_forward.19
$region0: #{transformer_forward.19}
  #allocation0 [shape = 'u32[]', space=smem, size = 0x4, offset = 0x4, fixed_abs, tag = 'smem constant byte address 0x4 - core index']
  #allocation1 [shape = 'u32[144,128]{1,0:T(1,128)}', space=vmem, size = 0x12000, scoped, tag = 'internal scratch']
  %s0 = inlined_call_operand.vmem [shape: f32[2,4,8,16], index: 0, kind: input, shape index: {}]
  %s1 = inlined_call_operand.vmem [shape: f32[2,8,16], index: 1, kind: input, shape index: {}]
  %s2 = inlined_call_operand.vmem [shape: f32[2,8,16], index: 2, kind: input, shape index: {}]
  %s3 = inlined_call_operand.vmem [shape: f32[2,4,8,16], index: 3, kind: output, shape index: {}]
  %s4 = sld [smem:[#allocation0]]
  $region45: #{transformer_forward.19} parent=0
    _
  %s6 = ssub.s32 1, %s4
  %s7 = scalar_select 0, %s6, %s4
  loop: start=0, step=1, limit=10
  $region2: #{transformer_forward.19} parent=0 // loop_pre_header
    _
  $region3: #{transformer_forward.19} parent=0 // loop_header
    %s9 = sphi 0, %s13
    %p10 = scmp.ge.s32.totalorder %s9, 10
    %s16 = sphi 0, %s28
    %s17 = sphi 0, %s24
    %s18 = sphi 0, %s16
    %s19 = sphi 0, %s17
    %s20 = sphi 0, %s18
    %s21 = sphi 0, %s19
    %s33 = sphi 0, %s35
    %s36 = sphi 0, %s33
    %s37 = sphi 0, %s36
    %s53 = sphi 0, %s37
    %s59 = sphi 0, %s61
    %s62 = sphi 0, %s59
    %s63 = sphi 0, %s62
    %s79 = sphi 0, %s63
    %s85 = sphi 0, %s87
    %s88 = sphi 0, %s85
    %s89 = sphi 0, %s88
    %s105 = sphi 0, %s89
    %s113 = sphi 0, %s115
    %s116 = sphi 0, %s113
    %s117 = sphi 0, %s116
    %s133 = sphi 0, %s117
  $region4: #{transformer_forward.19} parent=0 // loop_header_branch
    %12 = sbr.rel (%p10) target = $region8
  $region5: #{transformer_forward.19} parent=0 // loop_body
    %s14 = ssub.s32 %s9, 1
    %s15 = ssub.s32 %s9, 2
    %s22 = sadd.s32 1, %s17
    %p23 = scmp.ge.s32.totalorder %s22, 4
    %s24 = scalar_select %p23, 0, %s22
    %s25 = sadd.s32 1, %s16
    %s26 = scalar_select %p23, %s25, %s16
    %p27 = scmp.ge.s32.totalorder %s26, 2
    %s28 = scalar_select %p27, 0, %s26
    %s29 = ssub.s32 %s16, %s28
    %s30 = ssub.s32 %s17, %s24
    %s31 = sor.u32 %s29, %s30
    %p32 = scmp.eq.s32.totalorder %s31, 0
    %s34 = sadd.s32 %s33, 1
    %s35 = scalar_select %p32, %s33, %s34
    %p38 = pneg %p32
    %p39 = scmp.eq.s32.totalorder %s9, 7
    %p40 = por %p38, %p39
    %p41 = scmp.ne.s32.totalorder %s33, %s36
    %p42 = scmp.eq.s32.totalorder %s9, 0
    %p43 = por %p41, %p42
    %p44 = scmp.ne.s32.totalorder %s33, %s36
    %p45 = scmp.eq.s32.totalorder %s14, 7
    %p46 = por %p44, %p45
    %p47 = scmp.ne.s32.totalorder %s36, %s37
    %p48 = scmp.eq.s32.totalorder %s14, 0
    %p49 = por %p47, %p48
    %p50 = scmp.ne.s32.totalorder %s36, %s37
    %p51 = scmp.eq.s32.totalorder %s15, 7
    %p52 = por %p50, %p51
    %p54 = scmp.ne.s32.totalorder %s37, %s53
    %p55 = scmp.eq.s32.totalorder %s15, 0
    %p56 = por %p54, %p55
    %s57 = ssub.s32 %s16, %s28
    %p58 = scmp.eq.s32.totalorder %s57, 0
    %s60 = sadd.s32 %s59, 1
    %s61 = scalar_select %p58, %s59, %s60
    %p64 = pneg %p58
    %p65 = scmp.eq.s32.totalorder %s9, 7
    %p66 = por %p64, %p65
    %p67 = scmp.ne.s32.totalorder %s59, %s62
    %p68 = scmp.eq.s32.totalorder %s9, 0
    %p69 = por %p67, %p68
    %p70 = scmp.ne.s32.totalorder %s59, %s62
    %p71 = scmp.eq.s32.totalorder %s14, 7
    %p72 = por %p70, %p71
    %p73 = scmp.ne.s32.totalorder %s62, %s63
    %p74 = scmp.eq.s32.totalorder %s14, 0
    %p75 = por %p73, %p74
    %p76 = scmp.ne.s32.totalorder %s62, %s63
    %p77 = scmp.eq.s32.totalorder %s15, 7
    %p78 = por %p76, %p77
    %p80 = scmp.ne.s32.totalorder %s63, %s79
    %p81 = scmp.eq.s32.totalorder %s15, 0
    %p82 = por %p80, %p81
    %s83 = ssub.s32 %s16, %s28
    %p84 = scmp.eq.s32.totalorder %s83, 0
    %s86 = sadd.s32 %s85, 1
    %s87 = scalar_select %p84, %s85, %s86
    %p90 = pneg %p84
    %p91 = scmp.eq.s32.totalorder %s9, 7
    %p92 = por %p90, %p91
    %p93 = scmp.ne.s32.totalorder %s85, %s88
    %p94 = scmp.eq.s32.totalorder %s9, 0
    %p95 = por %p93, %p94
    %p96 = scmp.ne.s32.totalorder %s85, %s88
    %p97 = scmp.eq.s32.totalorder %s14, 7
    %p98 = por %p96, %p97
    %p99 = scmp.ne.s32.totalorder %s88, %s89
    %p100 = scmp.eq.s32.totalorder %s14, 0
    %p101 = por %p99, %p100
    %p102 = scmp.ne.s32.totalorder %s88, %s89
    %p103 = scmp.eq.s32.totalorder %s15, 7
    %p104 = por %p102, %p103
    %p106 = scmp.ne.s32.totalorder %s89, %s105
    %p107 = scmp.eq.s32.totalorder %s15, 0
    %p108 = por %p106, %p107
    %s109 = ssub.s32 %s16, %s28
    %s110 = ssub.s32 %s17, %s24
    %s111 = sor.u32 %s109, %s110
    %p112 = scmp.eq.s32.totalorder %s111, 0
    %s114 = sadd.s32 %s113, 1
    %s115 = scalar_select %p112, %s113, %s114
    %p118 = pneg %p112
    %p119 = scmp.eq.s32.totalorder %s9, 7
    %p120 = por %p118, %p119
    %p121 = scmp.ne.s32.totalorder %s113, %s116
    %p122 = scmp.eq.s32.totalorder %s9, 0
    %p123 = por %p121, %p122
    %p124 = scmp.ne.s32.totalorder %s113, %s116
    %p125 = scmp.eq.s32.totalorder %s14, 7
    %p126 = por %p124, %p125
    %p127 = scmp.ne.s32.totalorder %s116, %s117
    %p128 = scmp.eq.s32.totalorder %s14, 0
    %p129 = por %p127, %p128
    %p130 = scmp.ne.s32.totalorder %s116, %s117
    %p131 = scmp.eq.s32.totalorder %s15, 7
    %p132 = por %p130, %p131
    %p134 = scmp.ne.s32.totalorder %s117, %s133
    %p135 = scmp.eq.s32.totalorder %s15, 0
    %p136 = por %p134, %p135
    %p137 = scmp.le.s32.totalorder 1, %s9
    %p138 = scmp.lt.s32.totalorder %s9, 9
    %p139 = pnand %p137, %p138
    %p140 = pneg %p139
    // Predicated region
    $region9: #{transformer_forward.19} parent=5 // pred_check
      _
    $region10: #{transformer_forward.19} parent=5 // pred_check_branch
      %142 = sbr.rel (%p139) target = $region12
    $region11: #{transformer_forward.19} parent=5 // pred_region
      %s143 = ssub.s32 %s9, 1
    $region12: #{transformer_forward.19} parent=5 // pred_fallthru
      _
    %p144 = scmp.lt.s32.totalorder %s9, 8
    // Predicated region
    $region13: #{transformer_forward.19} parent=5 // pred_check
      %p145 = pneg %p144
    $region14: #{transformer_forward.19} parent=5 // pred_check_branch
      %147 = sbr.rel (%p145) target = $region16
    $region15: #{transformer_forward.19} parent=5 // pred_region
      // Predicated region
      $region17: #{transformer_forward.19} parent=15 // pred_check
        %p148 = pneg %p43
      $region18: #{transformer_forward.19} parent=15 // pred_check_branch
        %150 = sbr.rel (%p148) target = $region20
      $region19: #{transformer_forward.19} parent=15 // pred_region
        %p151 = scmp.lt.s32.totalorder %s16, 1
        %s152 = scalar_select %p151, %s16, 1
        %p153 = scmp.lt.s32.totalorder %s17, 3
        %s154 = scalar_select %p153, %s17, 3
        %s155 = smul.addr %s152, 4
        %s156 = sadd.s32 %s154, %s155
        %s157 = smul.addr %s156, 8
        %s158 = scalar_lea.vmem %s0, %s157
      $region20: #{transformer_forward.19} parent=15 // pred_fallthru
        _
      // Predicated region
      $region21: #{transformer_forward.19} parent=15 // pred_check
        %p159 = pneg %p69
      $region22: #{transformer_forward.19} parent=15 // pred_check_branch
        %161 = sbr.rel (%p159) target = $region24
      $region23: #{transformer_forward.19} parent=15 // pred_region
        %p162 = scmp.lt.s32.totalorder %s16, 1
        %s163 = scalar_select %p162, %s16, 1
        %s164 = smul.addr %s163, 8
        %s165 = scalar_lea.vmem %s1, %s164
      $region24: #{transformer_forward.19} parent=15 // pred_fallthru
        _
      // Predicated region
      $region25: #{transformer_forward.19} parent=15 // pred_check
        %p166 = pneg %p95
      $region26: #{transformer_forward.19} parent=15 // pred_check_branch
        %168 = sbr.rel (%p166) target = $region28
      $region27: #{transformer_forward.19} parent=15 // pred_region
        %p169 = scmp.lt.s32.totalorder %s16, 1
        %s170 = scalar_select %p169, %s16, 1
        %s171 = smul.addr %s170, 8
        %s172 = scalar_lea.vmem %s2, %s171
      $region28: #{transformer_forward.19} parent=15 // pred_fallthru
        _
    $region16: #{transformer_forward.19} parent=5 // pred_fallthru
      _
    %p173 = scmp.le.s32.totalorder 1, %s9
    %p174 = scmp.lt.s32.totalorder %s9, 9
    %p175 = pnand %p173, %p174
    %p176 = pneg %p175
    // Predicated region
    $region29: #{transformer_forward.19} parent=5 // pred_check
      _
    $region30: #{transformer_forward.19} parent=5 // pred_check_branch
      %178 = sbr.rel (%p175) target = $region32
    $region31: #{transformer_forward.19} parent=5 // pred_region
      %s179 = ssub.s32 %s9, 1
      %p180 = scmp.lt.s32.totalorder %s18, 1
      %s181 = scalar_select %p180, %s18, 1
      %p182 = scmp.lt.s32.totalorder %s19, 3
      %s183 = scalar_select %p182, %s19, 3
      %s184 = smul.addr %s181, 4
      %s185 = sadd.s32 %s183, %s184
      %s186 = smul.addr %s185, 8
      %s187 = scalar_lea.vmem %s0, %s186
      %p188 = pneg %p49
      %p189 = pneg %p46
      %p190 = scmp.lt.s32.totalorder %s18, 1
      %s191 = scalar_select %p190, %s18, 1
      %s192 = smul.addr %s191, 8
      %s193 = scalar_lea.vmem %s1, %s192
      %p194 = pneg %p75
      %p195 = pneg %p72
      %p196 = scmp.lt.s32.totalorder %s18, 1
      %s197 = scalar_select %p196, %s18, 1
      %s198 = smul.addr %s197, 8
      %s199 = scalar_lea.vmem %s2, %s198
      %p200 = pneg %p101
      %p201 = pneg %p98
      %p202 = pneg %p129
      %p203 = pneg %p126
      %p204 = scmp.lt.s32.totalorder %s18, 1
      %s205 = scalar_select %p204, %s18, 1
      %p206 = scmp.lt.s32.totalorder %s19, 3
      %s207 = scalar_select %p206, %s19, 3
      %s208 = smul.addr %s205, 4
      %s209 = sadd.s32 %s207, %s208
      %s210 = smul.addr %s209, 8
      %s211 = scalar_lea.vmem %s3, %s210
      %p212 = scmp.lt.s32.totalorder %s18, 1
      %s213 = scalar_select %p212, %s18, 1
      %p214 = scmp.lt.s32.totalorder %s19, 3
      %s215 = scalar_select %p214, %s19, 3
      %s216 = smul.addr %s213, 4
      %s217 = sadd.s32 %s215, %s216
      %s218 = smul.addr %s217, 8
      %s219 = scalar_lea.vmem %s0, %s218
      %p220 = scmp.lt.s32.totalorder %s18, 1
      %s221 = scalar_select %p220, %s18, 1
      %s222 = smul.addr %s221, 8
      %s223 = scalar_lea.vmem %s1, %s222
      %p224 = scmp.lt.s32.totalorder %s18, 1
      %s225 = scalar_select %p224, %s18, 1
      %s226 = smul.addr %s225, 8
      %s227 = scalar_lea.vmem %s2, %s226
      %p228 = scmp.lt.s32.totalorder %s18, 1
      %s229 = scalar_select %p228, %s18, 1
      %p230 = scmp.lt.s32.totalorder %s19, 3
      %s231 = scalar_select %p230, %s19, 3
      %s232 = smul.addr %s229, 4
      %s233 = sadd.s32 %s231, %s232
      %s234 = smul.addr %s233, 8
      %s235 = scalar_lea.vmem %s3, %s234
      %v236 = vld [vmem:[%s219] sm:$0xff]
      %v237 = vmul.f32 %v236, 0.25
      %v238 = vld [vmem:[%s223] sm:$0xff]
      %v239 = vld [vmem:[%s227] sm:$0xff]
      %vm240 = vcmask 130048
      %v242 = vsel %vm240, %v237, 0
      %v245 = vsel %vm240, %v238, 0
      %247 = vmatprep.subr.mxu0 0.0
      %248 = vmatpush1.xpose.msra.mxu0 %v245
      %249 = vmatprep.subr.mxu0 0.0
      %250 = vmatpush1.xpose.msra.mxu0 0.0
      %251 = vmatprep.subr.mxu0 0.0
      %252 = vmatpush1.xpose.msra.mxu0 0.0
      %253 = vmatprep.subr.mxu0 0.0
      %254 = vmatpush1.xpose.msra.mxu0 0.0
      %255 = vmatprep.subr.mxu0 0.0
      %256 = vmatpush1.xpose.msra.mxu0 0.0
      %257 = vmatprep.subr.mxu0 0.0
      %258 = vmatpush1.xpose.msra.mxu0 0.0
      %259 = vmatprep.subr.mxu0 0.0
      %260 = vmatpush1.xpose.msra.mxu0 0.0
      %261 = vmatprep.subr.mxu0 0.0
      %262 = vmatpush1.xpose.msra.mxu0 0.0
      %263 = vmatprep.subr.mxu0 0.0
      %264 = vmatpush1.xpose.msra.mxu0 0.0
      %265 = vmatprep.subr.mxu0 0.0
      %266 = vmatpush1.xpose.msra.mxu0 0.0
      %267 = vmatprep.subr.mxu0 0.0
      %268 = vmatpush1.xpose.msra.mxu0 0.0
      %269 = vmatprep.subr.mxu0 0.0
      %270 = vmatpush1.xpose.msra.mxu0 0.0
      %271 = vmatprep.subr.mxu0 0.0
      %272 = vmatpush1.xpose.msra.mxu0 0.0
      %273 = vmatprep.subr.mxu0 0.0
      %274 = vmatpush1.xpose.msra.mxu0 0.0
      %275 = vmatprep.subr.mxu0 0.0
      %276 = vmatpush1.xpose.msra.mxu0 0.0
      %277 = vmatprep.subr.mxu0 0.0
      %278 = vmatpush1.xpose.msra.mxu0 0.0
      %279 = vmatprep.subr.mxu0 0.0
      %280 = vmatpush1.xpose.msra.mxu0 0.0
      %281 = vmatprep.subr.mxu0 0.0
      %282 = vmatpush1.xpose.msra.mxu0 0.0
      %283 = vmatprep.subr.mxu0 0.0
      %284 = vmatpush1.xpose.msra.mxu0 0.0
      %285 = vmatprep.subr.mxu0 0.0
      %286 = vmatpush1.xpose.msra.mxu0 0.0
      %287 = vmatprep.subr.mxu0 0.0
      %288 = vmatpush1.xpose.msra.mxu0 0.0
      %289 = vmatprep.subr.mxu0 0.0
      %290 = vmatpush1.xpose.msra.mxu0 0.0
      %291 = vmatprep.subr.mxu0 0.0
      %292 = vmatpush1.xpose.msra.mxu0 0.0
      %293 = vmatprep.subr.mxu0 0.0
      %294 = vmatpush1.xpose.msra.mxu0 0.0
      %295 = vmatprep.subr.mxu0 0.0
      %296 = vmatpush1.xpose.msra.mxu0 0.0
      %297 = vmatprep.subr.mxu0 0.0
      %298 = vmatpush1.xpose.msra.mxu0 0.0
      %299 = vmatprep.subr.mxu0 0.0
      %300 = vmatpush1.xpose.msra.mxu0 0.0
      %301 = vmatprep.subr.mxu0 0.0
      %302 = vmatpush1.xpose.msra.mxu0 0.0
      %303 = vmatprep.subr.mxu0 0.0
      %304 = vmatpush1.xpose.msra.mxu0 0.0
      %305 = vmatprep.subr.mxu0 0.0
      %306 = vmatpush1.xpose.msra.mxu0 0.0
      %307 = vmatprep.subr.mxu0 0.0
      %308 = vmatpush1.xpose.msra.mxu0 0.0
      %309 = vmatprep.subr.mxu0 0.0
      %310 = vmatpush1.xpose.msra.mxu0 0.0
      %311 = vmatprep.mubr.f32.mxu0 0.0
      %312 = vmatmul.mubr.f32.gmra.mrb[0].mxu0 %v242
      %v313 = vpop.f32.mrb[0].mxu0
      %v314 = vadd.f32 0.0, %v313
      %v315 = vpop.f32.mrb[0].mxu0
      %316 = vdwg.mxu0
      %vm317 = vcmask 64512
      %v318 = vsel %vm317, %v314, -inf
      %319 = vmax.xlane.f32.xlu0 %v318
      %v320 = vpop.xlane.xlu0 %319
      %v321 = vsub.f32 %v314, %v320
      %v322 = vmul.f32 %v321, 1.442695
      %v323 = vpow.pop %v322
      %v324 = vsel %vm317, %v323, 0.0
      %325 = vadd.xlane.f32.xlu0 %v324
      %v326 = vpop.xlane.xlu0 %325
      %v327 = vrcp.pop %v326
      %v328 = vmul.f32 %v323, %v327
      %v330 = vsel %vm317, %v328, 0
      %332 = vmatprep.subr.mxu0 0.0
      %333 = vmatpush1.msra.mxu0 %v239
      %334 = vmatprep.subr.mxu0 0.0
      %335 = vmatpush1.msra.mxu0 0.0
      %336 = vmatprep.subr.mxu0 0.0
      %337 = vmatpush1.msra.mxu0 0.0
      %338 = vmatprep.subr.mxu0 0.0
      %339 = vmatpush1.msra.mxu0 0.0
      %340 = vmatprep.subr.mxu0 0.0
      %341 = vmatpush1.msra.mxu0 0.0
      %342 = vmatprep.subr.mxu0 0.0
      %343 = vmatpush1.msra.mxu0 0.0
      %344 = vmatprep.subr.mxu0 0.0
      %345 = vmatpush1.msra.mxu0 0.0
      %346 = vmatprep.subr.mxu0 0.0
      %347 = vmatpush1.msra.mxu0 0.0
      %348 = vmatprep.subr.mxu0 0.0
      %349 = vmatpush1.msra.mxu0 0.0
      %350 = vmatprep.subr.mxu0 0.0
      %351 = vmatpush1.msra.mxu0 0.0
      %352 = vmatprep.subr.mxu0 0.0
      %353 = vmatpush1.msra.mxu0 0.0
      %354 = vmatprep.subr.mxu0 0.0
      %355 = vmatpush1.msra.mxu0 0.0
      %356 = vmatprep.subr.mxu0 0.0
      %357 = vmatpush1.msra.mxu0 0.0
      %358 = vmatprep.subr.mxu0 0.0
      %359 = vmatpush1.msra.mxu0 0.0
      %360 = vmatprep.subr.mxu0 0.0
      %361 = vmatpush1.msra.mxu0 0.0
      %362 = vmatprep.subr.mxu0 0.0
      %363 = vmatpush1.msra.mxu0 0.0
      %364 = vmatprep.subr.mxu0 0.0
      %365 = vmatpush1.msra.mxu0 0.0
      %366 = vmatprep.subr.mxu0 0.0
      %367 = vmatpush1.msra.mxu0 0.0
      %368 = vmatprep.subr.mxu0 0.0
      %369 = vmatpush1.msra.mxu0 0.0
      %370 = vmatprep.subr.mxu0 0.0
      %371 = vmatpush1.msra.mxu0 0.0
      %372 = vmatprep.subr.mxu0 0.0
      %373 = vmatpush1.msra.mxu0 0.0
      %374 = vmatprep.subr.mxu0 0.0
      %375 = vmatpush1.msra.mxu0 0.0
      %376 = vmatprep.subr.mxu0 0.0
      %377 = vmatpush1.msra.mxu0 0.0
      %378 = vmatprep.subr.mxu0 0.0
      %379 = vmatpush1.msra.mxu0 0.0
      %380 = vmatprep.subr.mxu0 0.0
      %381 = vmatpush1.msra.mxu0 0.0
      %382 = vmatprep.subr.mxu0 0.0
      %383 = vmatpush1.msra.mxu0 0.0
      %384 = vmatprep.subr.mxu0 0.0
      %385 = vmatpush1.msra.mxu0 0.0
      %386 = vmatprep.subr.mxu0 0.0
      %387 = vmatpush1.msra.mxu0 0.0
      %388 = vmatprep.subr.mxu0 0.0
      %389 = vmatpush1.msra.mxu0 0.0
      %390 = vmatprep.subr.mxu0 0.0
      %391 = vmatpush1.msra.mxu0 0.0
      %392 = vmatprep.subr.mxu0 0.0
      %393 = vmatpush1.msra.mxu0 0.0
      %394 = vmatprep.subr.mxu0 0.0
      %395 = vmatpush1.msra.mxu0 0.0
      %396 = vmatprep.mubr.f32.mxu0 0.0
      %397 = vmatmul.mubr.f32.gmra.mrb[0].mxu0 %v330
      %v398 = vpop.f32.mrb[0].mxu0
      %v399 = vadd.f32 0.0, %v398
      %v400 = vpop.f32.mrb[0].mxu0
      %401 = vdwg.mxu0
      %402 = vst.msk [vmem:[%s235] sm:$0xff] %vm240, %v399
      %p403 = scmp.lt.s32.totalorder %s18, 1
      %s404 = scalar_select %p403, %s18, 1
      %p405 = scmp.lt.s32.totalorder %s19, 3
      %s406 = scalar_select %p405, %s19, 3
      %s407 = smul.addr %s404, 4
      %s408 = sadd.s32 %s406, %s407
      %s409 = smul.addr %s408, 8
      %s410 = scalar_lea.vmem %s3, %s409
      // Predicated region
      $region33: #{transformer_forward.19} parent=31 // pred_check
        %p411 = pneg %p126
      $region34: #{transformer_forward.19} parent=31 // pred_check_branch
        %413 = sbr.rel (%p411) target = $region36
      $region35: #{transformer_forward.19} parent=31 // pred_region
        _
      $region36: #{transformer_forward.19} parent=31 // pred_fallthru
        _
    $region32: #{transformer_forward.19} parent=5 // pred_fallthru
      _
    %p414 = scmp.le.s32.totalorder 2, %s9
    // Predicated region
    $region37: #{transformer_forward.19} parent=5 // pred_check
      %p415 = pneg %p414
    $region38: #{transformer_forward.19} parent=5 // pred_check_branch
      %417 = sbr.rel (%p415) target = $region40
    $region39: #{transformer_forward.19} parent=5 // pred_region
      %s418 = ssub.s32 %s9, 2
      // Predicated region
      $region41: #{transformer_forward.19} parent=39 // pred_check
        %p419 = pneg %p132
      $region42: #{transformer_forward.19} parent=39 // pred_check_branch
        %421 = sbr.rel (%p419) target = $region44
      $region43: #{transformer_forward.19} parent=39 // pred_region
        %p422 = scmp.lt.s32.totalorder %s20, 1
        %s423 = scalar_select %p422, %s20, 1
        %p424 = scmp.lt.s32.totalorder %s21, 3
        %s425 = scalar_select %p424, %s21, 3
        %s426 = smul.addr %s423, 4
        %s427 = sadd.s32 %s425, %s426
        %s428 = smul.addr %s427, 8
        %s429 = scalar_lea.vmem %s3, %s428
      $region44: #{transformer_forward.19} parent=39 // pred_fallthru
        _
    $region40: #{transformer_forward.19} parent=5 // pred_fallthru
      _
  $region6: #{transformer_forward.19} parent=0 // loop_footer
    %s13 = sadd.s32 1, %s9
  $region7: #{transformer_forward.19} parent=0 // loop_footer_branch
    %8 = sbr.rel target = $region3
  $region8: #{transformer_forward.19} parent=0 // loop_exit
    _

// kernel: transformer_forward.20
$region0: #{transformer_forward.20}
  #allocation0 [shape = 'u32[]', space=smem, size = 0x4, offset = 0x4, fixed_abs, tag = 'smem constant byte address 0x4 - core index']
  #allocation1 [shape = 'u32[144,128]{1,0:T(1,128)}', space=vmem, size = 0x12000, scoped, tag = 'internal scratch']
  #allocation2 [shape = 'f32[16,32]{1,0:T(8,128)}', space=vmem, size = 0x2000, scoped, tag = 'scratch operand']
  %s0 = inlined_call_operand.vmem [shape: f32[16,64], index: 0, kind: input, shape index: {}]
  %s1 = inlined_call_operand.vmem [shape: f32[64,32], index: 1, kind: input, shape index: {}]
  %s2 = inlined_call_operand.vmem [shape: f32[16,32], index: 2, kind: output, shape index: {}]
  %s3 = sld [smem:[#allocation0]]
  $region26: #{transformer_forward.20} parent=0
    _
  %s5 = ssub.s32 1, %s3
  %s6 = scalar_select 0, %s5, %s3
  // Predicated region
  $region2: #{transformer_forward.20} parent=0 // pred_check
    _
  $region3: #{transformer_forward.20} parent=0 // pred_check_branch
    %8 = sbr.rel (0) target = $region5
  $region4: #{transformer_forward.20} parent=0 // pred_region
    _
  $region5: #{transformer_forward.20} parent=0 // pred_fallthru
    _
  // Predicated region
  $region6: #{transformer_forward.20} parent=0 // pred_check
    _
  $region7: #{transformer_forward.20} parent=0 // pred_check_branch
    %10 = sbr.rel (0) target = $region9
  $region8: #{transformer_forward.20} parent=0 // pred_region
    _
  $region9: #{transformer_forward.20} parent=0 // pred_fallthru
    _
  %p11 = scmp.eq.s32.totalorder 0, 0
  // Predicated region
  $region10: #{transformer_forward.20} parent=0 // pred_check
    %p12 = pneg %p11
  $region11: #{transformer_forward.20} parent=0 // pred_check_branch
    %14 = sbr.rel (%p12) target = $region13
  $region12: #{transformer_forward.20} parent=0 // pred_region
    %vm15 = vcmask 261120
    %16 = vst.msk [vmem:[#allocation2] sm:$0xff] %vm15, 0.0
    %17 = vst.msk [vmem:[#allocation2 + $0x8] sm:$0xff] %vm15, 0.0
  $region13: #{transformer_forward.20} parent=0 // pred_fallthru
    _
  %v18 = vld [vmem:[#allocation2] sm:$0xff]
  %v19 = vld [vmem:[#allocation2 + $0x8] sm:$0xff]
  %v20 = vld [vmem:[%s0] sm:$0xff]
  %v21 = vld [vmem:[%s0 + $0x8] sm:$0xff]
  %v22 = vld [vmem:[%s1] sm:$0xff]
  %v23 = vld [vmem:[%s1 + $0x8] sm:$0xff]
  %v24 = vld [vmem:[%s1 + $0x10] sm:$0xff]
  %v25 = vld [vmem:[%s1 + $0x18] sm:$0xff]
  %v26 = vld [vmem:[%s1 + $0x20] sm:$0xff]
  %v27 = vld [vmem:[%s1 + $0x28] sm:$0xff]
  %v28 = vld [vmem:[%s1 + $0x30] sm:$0xff]
  %v29 = vld [vmem:[%s1 + $0x38] sm:$0xff]
  %vm30 = vcmask 523264
  %v32 = vsel %vm30, %v20, 0
  %v35 = vsel %vm30, %v21, 0
  %37 = vmatprep.subr.mxu0 0.0
  %38 = vmatpush1.msra.mxu0 %v22
  %39 = vmatprep.subr.mxu0 0.0
  %40 = vmatpush1.msra.mxu0 %v23
  %41 = vmatprep.subr.mxu0 0.0
  %42 = vmatpush1.msra.mxu0 %v24
  %43 = vmatprep.subr.mxu0 0.0
  %44 = vmatpush1.msra.mxu0 %v25
  %45 = vmatprep.subr.mxu0 0.0
  %46 = vmatpush1.msra.mxu0 %v26
  %47 = vmatprep.subr.mxu0 0.0
  %48 = vmatpush1.msra.mxu0 %v27
  %49 = vmatprep.subr.mxu0 0.0
  %50 = vmatpush1.msra.mxu0 %v28
  %51 = vmatprep.subr.mxu0 0.0
  %52 = vmatpush1.msra.mxu0 %v29
  %53 = vmatprep.subr.mxu0 0.0
  %54 = vmatpush1.msra.mxu0 0.0
  %55 = vmatprep.subr.mxu0 0.0
  %56 = vmatpush1.msra.mxu0 0.0
  %57 = vmatprep.subr.mxu0 0.0
  %58 = vmatpush1.msra.mxu0 0.0
  %59 = vmatprep.subr.mxu0 0.0
  %60 = vmatpush1.msra.mxu0 0.0
  %61 = vmatprep.subr.mxu0 0.0
  %62 = vmatpush1.msra.mxu0 0.0
  %63 = vmatprep.subr.mxu0 0.0
  %64 = vmatpush1.msra.mxu0 0.0
  %65 = vmatprep.subr.mxu0 0.0
  %66 = vmatpush1.msra.mxu0 0.0
  %67 = vmatprep.subr.mxu0 0.0
  %68 = vmatpush1.msra.mxu0 0.0
  %69 = vmatprep.subr.mxu0 0.0
  %70 = vmatpush1.msra.mxu0 0.0
  %71 = vmatprep.subr.mxu0 0.0
  %72 = vmatpush1.msra.mxu0 0.0
  %73 = vmatprep.subr.mxu0 0.0
  %74 = vmatpush1.msra.mxu0 0.0
  %75 = vmatprep.subr.mxu0 0.0
  %76 = vmatpush1.msra.mxu0 0.0
  %77 = vmatprep.subr.mxu0 0.0
  %78 = vmatpush1.msra.mxu0 0.0
  %79 = vmatprep.subr.mxu0 0.0
  %80 = vmatpush1.msra.mxu0 0.0
  %81 = vmatprep.subr.mxu0 0.0
  %82 = vmatpush1.msra.mxu0 0.0
  %83 = vmatprep.subr.mxu0 0.0
  %84 = vmatpush1.msra.mxu0 0.0
  %85 = vmatprep.subr.mxu0 0.0
  %86 = vmatpush1.msra.mxu0 0.0
  %87 = vmatprep.subr.mxu0 0.0
  %88 = vmatpush1.msra.mxu0 0.0
  %89 = vmatprep.subr.mxu0 0.0
  %90 = vmatpush1.msra.mxu0 0.0
  %91 = vmatprep.subr.mxu0 0.0
  %92 = vmatpush1.msra.mxu0 0.0
  %93 = vmatprep.subr.mxu0 0.0
  %94 = vmatpush1.msra.mxu0 0.0
  %95 = vmatprep.subr.mxu0 0.0
  %96 = vmatpush1.msra.mxu0 0.0
  %97 = vmatprep.subr.mxu0 0.0
  %98 = vmatpush1.msra.mxu0 0.0
  %99 = vmatprep.subr.mxu0 0.0
  %100 = vmatpush1.msra.mxu0 0.0
  %101 = vmatprep.mubr.f32.mxu0 0.0
  %102 = vmatmul.mubr.f32.gmra.mrb[0].mxu0 %v32
  %v103 = vpop.f32.mrb[0].mxu0
  %v104 = vadd.f32 0.0, %v103
  %v105 = vpop.f32.mrb[0].mxu0
  %106 = vmatprep.mubr.f32.mxu0 0.0
  %107 = vmatmul.mubr.f32.gmra.mrb[0].mxu0 %v35
  %v108 = vpop.f32.mrb[0].mxu0
  %v109 = vadd.f32 0.0, %v108
  %v110 = vpop.f32.mrb[0].mxu0
  %111 = vdwg.mxu0
  %v112 = vadd.f32 %v18, %v104
  %v113 = vadd.f32 %v19, %v109
  %vm114 = vcmask 261120
  %115 = vst.msk [vmem:[#allocation2] sm:$0xff] %vm114, %v112
  %116 = vst.msk [vmem:[#allocation2 + $0x8] sm:$0xff] %vm114, %v113
  // Predicated region
  $region14: #{transformer_forward.20} parent=0 // pred_check
    %p117 = pneg %p11
  $region15: #{transformer_forward.20} parent=0 // pred_check_branch
    %119 = sbr.rel (%p117) target = $region17
  $region16: #{transformer_forward.20} parent=0 // pred_region
    %v120 = vld [vmem:[#allocation2] sm:$0xff]
    %v121 = vld [vmem:[#allocation2 + $0x8] sm:$0xff]
    %122 = vst.msk [vmem:[%s2] sm:$0xff] %vm114, %v120
    %123 = vst.msk [vmem:[%s2 + $0x8] sm:$0xff] %vm114, %v121
  $region17: #{transformer_forward.20} parent=0 // pred_fallthru
    _
  // Predicated region
  $region18: #{transformer_forward.20} parent=0 // pred_check
    _
  $region19: #{transformer_forward.20} parent=0 // pred_check_branch
    %125 = sbr.rel (0) target = $region21
  $region20: #{transformer_forward.20} parent=0 // pred_region
    _
  $region21: #{transformer_forward.20} parent=0 // pred_fallthru
    _
  // Predicated region
  $region22: #{transformer_forward.20} parent=0 // pred_check
    _
  $region23: #{transformer_forward.20} parent=0 // pred_check_branch
    %127 = sbr.rel (0) target = $region25
  $region24: #{transformer_forward.20} parent=0 // pred_region
    _
  $region25: #{transformer_forward.20} parent=0 // pred_fallthru
    _

// kernel: transformer_forward.22
$region0: #{transformer_forward.22}
  #allocation0 [shape = 'u32[]', space=smem, size = 0x4, offset = 0x4, fixed_abs, tag = 'smem constant byte address 0x4 - core index']
  #allocation1 [shape = 'u32[144,128]{1,0:T(1,128)}', space=vmem, size = 0x12000, scoped, tag = 'internal scratch']
  #allocation2 [shape = 'f32[16,128]{1,0:T(8,128)}', space=vmem, size = 0x2000, scoped, tag = 'scratch operand']
  %s0 = inlined_call_operand.vmem [shape: f32[16,32], index: 0, kind: input, shape index: {}]
  %s1 = inlined_call_operand.vmem [shape: f32[32,128], index: 1, kind: input, shape index: {}]
  %s2 = inlined_call_operand.vmem [shape: f32[1,128], index: 2, kind: input, shape index: {}]
  %s3 = inlined_call_operand.vmem [shape: f32[16,128], index: 3, kind: output, shape index: {}]
  %s4 = sld [smem:[#allocation0]]
  $region30: #{transformer_forward.22} parent=0
    _
  %s6 = ssub.s32 1, %s4
  %s7 = scalar_select 0, %s6, %s4
  // Predicated region
  $region2: #{transformer_forward.22} parent=0 // pred_check
    _
  $region3: #{transformer_forward.22} parent=0 // pred_check_branch
    %9 = sbr.rel (0) target = $region5
  $region4: #{transformer_forward.22} parent=0 // pred_region
    _
  $region5: #{transformer_forward.22} parent=0 // pred_fallthru
    _
  // Predicated region
  $region6: #{transformer_forward.22} parent=0 // pred_check
    _
  $region7: #{transformer_forward.22} parent=0 // pred_check_branch
    %11 = sbr.rel (0) target = $region9
  $region8: #{transformer_forward.22} parent=0 // pred_region
    _
  $region9: #{transformer_forward.22} parent=0 // pred_fallthru
    _
  // Predicated region
  $region10: #{transformer_forward.22} parent=0 // pred_check
    _
  $region11: #{transformer_forward.22} parent=0 // pred_check_branch
    %13 = sbr.rel (0) target = $region13
  $region12: #{transformer_forward.22} parent=0 // pred_region
    _
  $region13: #{transformer_forward.22} parent=0 // pred_fallthru
    _
  %p14 = scmp.eq.s32.totalorder 0, 0
  // Predicated region
  $region14: #{transformer_forward.22} parent=0 // pred_check
    %p15 = pneg %p14
  $region15: #{transformer_forward.22} parent=0 // pred_check_branch
    %17 = sbr.rel (%p15) target = $region17
  $region16: #{transformer_forward.22} parent=0 // pred_region
    %18 = vst [vmem:[#allocation2] sm:$0xff] 0.0
    %19 = vst [vmem:[#allocation2 + $0x8] sm:$0xff] 0.0
  $region17: #{transformer_forward.22} parent=0 // pred_fallthru
    _
  %v20 = vld [vmem:[#allocation2] sm:$0xff]
  %v21 = vld [vmem:[#allocation2 + $0x8] sm:$0xff]
  %v22 = vld [vmem:[%s0] sm:$0xff]
  %v23 = vld [vmem:[%s0 + $0x8] sm:$0xff]
  %v24 = vld [vmem:[%s1] sm:$0xff]
  %v25 = vld [vmem:[%s1 + $0x8] sm:$0xff]
  %v26 = vld [vmem:[%s1 + $0x10] sm:$0xff]
  %v27 = vld [vmem:[%s1 + $0x18] sm:$0xff]
  %vm28 = vcmask 261120
  %v30 = vsel %vm28, %v22, 0
  %v33 = vsel %vm28, %v23, 0
  %35 = vmatprep.subr.mxu0 0.0
  %36 = vmatpush1.msra.mxu0 %v24
  %37 = vmatprep.subr.mxu0 0.0
  %38 = vmatpush1.msra.mxu0 %v25
  %39 = vmatprep.subr.mxu0 0.0
  %40 = vmatpush1.msra.mxu0 %v26
  %41 = vmatprep.subr.mxu0 0.0
  %42 = vmatpush1.msra.mxu0 %v27
  %43 = vmatprep.subr.mxu0 0.0
  %44 = vmatpush1.msra.mxu0 0.0
  %45 = vmatprep.subr.mxu0 0.0
  %46 = vmatpush1.msra.mxu0 0.0
  %47 = vmatprep.subr.mxu0 0.0
  %48 = vmatpush1.msra.mxu0 0.0
  %49 = vmatprep.subr.mxu0 0.0
  %50 = vmatpush1.msra.mxu0 0.0
  %51 = vmatprep.subr.mxu0 0.0
  %52 = vmatpush1.msra.mxu0 0.0
  %53 = vmatprep.subr.mxu0 0.0
  %54 = vmatpush1.msra.mxu0 0.0
  %55 = vmatprep.subr.mxu0 0.0
  %56 = vmatpush1.msra.mxu0 0.0
  %57 = vmatprep.subr.mxu0 0.0
  %58 = vmatpush1.msra.mxu0 0.0
  %59 = vmatprep.subr.mxu0 0.0
  %60 = vmatpush1.msra.mxu0 0.0
  %61 = vmatprep.subr.mxu0 0.0
  %62 = vmatpush1.msra.mxu0 0.0
  %63 = vmatprep.subr.mxu0 0.0
  %64 = vmatpush1.msra.mxu0 0.0
  %65 = vmatprep.subr.mxu0 0.0
  %66 = vmatpush1.msra.mxu0 0.0
  %67 = vmatprep.subr.mxu0 0.0
  %68 = vmatpush1.msra.mxu0 0.0
  %69 = vmatprep.subr.mxu0 0.0
  %70 = vmatpush1.msra.mxu0 0.0
  %71 = vmatprep.subr.mxu0 0.0
  %72 = vmatpush1.msra.mxu0 0.0
  %73 = vmatprep.subr.mxu0 0.0
  %74 = vmatpush1.msra.mxu0 0.0
  %75 = vmatprep.subr.mxu0 0.0
  %76 = vmatpush1.msra.mxu0 0.0
  %77 = vmatprep.subr.mxu0 0.0
  %78 = vmatpush1.msra.mxu0 0.0
  %79 = vmatprep.subr.mxu0 0.0
  %80 = vmatpush1.msra.mxu0 0.0
  %81 = vmatprep.subr.mxu0 0.0
  %82 = vmatpush1.msra.mxu0 0.0
  %83 = vmatprep.subr.mxu0 0.0
  %84 = vmatpush1.msra.mxu0 0.0
  %85 = vmatprep.subr.mxu0 0.0
  %86 = vmatpush1.msra.mxu0 0.0
  %87 = vmatprep.subr.mxu0 0.0
  %88 = vmatpush1.msra.mxu0 0.0
  %89 = vmatprep.subr.mxu0 0.0
  %90 = vmatpush1.msra.mxu0 0.0
  %91 = vmatprep.subr.mxu0 0.0
  %92 = vmatpush1.msra.mxu0 0.0
  %93 = vmatprep.subr.mxu0 0.0
  %94 = vmatpush1.msra.mxu0 0.0
  %95 = vmatprep.subr.mxu0 0.0
  %96 = vmatpush1.msra.mxu0 0.0
  %97 = vmatprep.subr.mxu0 0.0
  %98 = vmatpush1.msra.mxu0 0.0
  %99 = vmatprep.mubr.f32.mxu0 0.0
  %100 = vmatmul.mubr.f32.gmra.mrb[0].mxu0 %v30
  %v101 = vpop.f32.mrb[0].mxu0
  %v102 = vadd.f32 0.0, %v101
  %v103 = vpop.f32.mrb[0].mxu0
  %104 = vmatprep.mubr.f32.mxu0 0.0
  %105 = vmatmul.mubr.f32.gmra.mrb[0].mxu0 %v33
  %v106 = vpop.f32.mrb[0].mxu0
  %v107 = vadd.f32 0.0, %v106
  %v108 = vpop.f32.mrb[0].mxu0
  %109 = vdwg.mxu0
  %v110 = vadd.f32 %v20, %v102
  %v111 = vadd.f32 %v21, %v107
  %112 = vst [vmem:[#allocation2] sm:$0xff] %v110
  %113 = vst [vmem:[#allocation2 + $0x8] sm:$0xff] %v111
  // Predicated region
  $region18: #{transformer_forward.22} parent=0 // pred_check
    %p114 = pneg %p14
  $region19: #{transformer_forward.22} parent=0 // pred_check_branch
    %116 = sbr.rel (%p114) target = $region21
  $region20: #{transformer_forward.22} parent=0 // pred_region
    %v117 = vld [vmem:[#allocation2] sm:$0xff]
    %v118 = vld [vmem:[#allocation2 + $0x8] sm:$0xff]
    %v119 = vld [vmem:[%s2] sm:$0x1]
    %v121 = vlaneseq
    %v122 = vshrl.u32 %v121, 7
    %v123 = vsub.s32 0, %v122
    %v124 = vrot.slane %v119, %v123
    %v126 = vadd.f32 %v117, %v124
    %v127 = vadd.f32 %v118, %v124
    %v128 = vmul.f32 %v126, 0.5
    %v129 = vmul.f32 %v127, 0.5
    %v130 = vmul.f32 %v126, 0.044715
    %v131 = vmul.f32 %v127, 0.044715
    %v132 = vmul.f32 %v130, %v126
    %v133 = vmul.f32 %v131, %v127
    %v134 = vmul.f32 %v132, %v126
    %v135 = vmul.f32 %v133, %v127
    %v136 = vadd.f32 %v126, %v134
    %v137 = vadd.f32 %v127, %v135
    %v138 = vmul.f32 %v136, 0.7978846
    %v139 = vmul.f32 %v137, 0.7978846
    %v140 = vtanh.pop %v138
    %v141 = vtanh.pop %v139
    %v142 = vadd.f32 %v140, 1.0
    %v143 = vadd.f32 %v141, 1.0
    %v144 = vmul.f32 %v128, %v142
    %v145 = vmul.f32 %v129, %v143
    %146 = vst [vmem:[%s3] sm:$0xff] %v144
    %147 = vst [vmem:[%s3 + $0x8] sm:$0xff] %v145
  $region21: #{transformer_forward.22} parent=0 // pred_fallthru
    _
  // Predicated region
  $region22: #{transformer_forward.22} parent=0 // pred_check
    _
  $region23: #{transformer_forward.22} parent=0 // pred_check_branch
    %149 = sbr.rel (0) target = $region25
  $region24: #{transformer_forward.22} parent=0 // pred_region
    _
  $region25: #{transformer_forward.22} parent=0 // pred_fallthru
    _
  // Predicated region
  $region26: #{transformer_forward.22} parent=0 // pred_check
    _
  $region27: #{transformer_forward.22} parent=0 // pred_check_branch
    %151 = sbr.rel (0) target = $region29
  $region28: #{transformer_forward.22} parent=0 // pred_region
    _
  $region29: #{transformer_forward.22} parent=0 // pred_fallthru
    _

// kernel: transformer_forward.23
$region0: #{transformer_forward.23}
  #allocation0 [shape = 'u32[]', space=smem, size = 0x4, offset = 0x4, fixed_abs, tag = 'smem constant byte address 0x4 - core index']
  #allocation1 [shape = 'u32[144,128]{1,0:T(1,128)}', space=vmem, size = 0x12000, scoped, tag = 'internal scratch']
  #allocation2 [shape = 'f32[16,32]{1,0:T(8,128)}', space=vmem, size = 0x2000, scoped, tag = 'scratch operand']
  %s0 = inlined_call_operand.vmem [shape: f32[16,128], index: 0, kind: input, shape index: {}]
  %s1 = inlined_call_operand.vmem [shape: f32[128,32], index: 1, kind: input, shape index: {}]
  %s2 = inlined_call_operand.vmem [shape: f32[1,32], index: 2, kind: input, shape index: {}]
  %s3 = inlined_call_operand.vmem [shape: f32[16,32], index: 3, kind: output, shape index: {}]
  %s4 = sld [smem:[#allocation0]]
  $region30: #{transformer_forward.23} parent=0
    _
  %s6 = ssub.s32 1, %s4
  %s7 = scalar_select 0, %s6, %s4
  // Predicated region
  $region2: #{transformer_forward.23} parent=0 // pred_check
    _
  $region3: #{transformer_forward.23} parent=0 // pred_check_branch
    %9 = sbr.rel (0) target = $region5
  $region4: #{transformer_forward.23} parent=0 // pred_region
    _
  $region5: #{transformer_forward.23} parent=0 // pred_fallthru
    _
  // Predicated region
  $region6: #{transformer_forward.23} parent=0 // pred_check
    _
  $region7: #{transformer_forward.23} parent=0 // pred_check_branch
    %11 = sbr.rel (0) target = $region9
  $region8: #{transformer_forward.23} parent=0 // pred_region
    _
  $region9: #{transformer_forward.23} parent=0 // pred_fallthru
    _
  // Predicated region
  $region10: #{transformer_forward.23} parent=0 // pred_check
    _
  $region11: #{transformer_forward.23} parent=0 // pred_check_branch
    %13 = sbr.rel (0) target = $region13
  $region12: #{transformer_forward.23} parent=0 // pred_region
    _
  $region13: #{transformer_forward.23} parent=0 // pred_fallthru
    _
  %p14 = scmp.eq.s32.totalorder 0, 0
  // Predicated region
  $region14: #{transformer_forward.23} parent=0 // pred_check
    %p15 = pneg %p14
  $region15: #{transformer_forward.23} parent=0 // pred_check_branch
    %17 = sbr.rel (%p15) target = $region17
  $region16: #{transformer_forward.23} parent=0 // pred_region
    %vm18 = vcmask 261120
    %19 = vst.msk [vmem:[#allocation2] sm:$0xff] %vm18, 0.0
    %20 = vst.msk [vmem:[#allocation2 + $0x8] sm:$0xff] %vm18, 0.0
  $region17: #{transformer_forward.23} parent=0 // pred_fallthru
    _
  %v21 = vld [vmem:[#allocation2] sm:$0xff]
  %v22 = vld [vmem:[#allocation2 + $0x8] sm:$0xff]
  %v23 = vld [vmem:[%s0] sm:$0xff]
  %v24 = vld [vmem:[%s0 + $0x8] sm:$0xff]
  %v25 = vld [vmem:[%s1] sm:$0xff]
  %v26 = vld [vmem:[%s1 + $0x8] sm:$0xff]
  %v27 = vld [vmem:[%s1 + $0x10] sm:$0xff]
  %v28 = vld [vmem:[%s1 + $0x18] sm:$0xff]
  %v29 = vld [vmem:[%s1 + $0x20] sm:$0xff]
  %v30 = vld [vmem:[%s1 + $0x28] sm:$0xff]
  %v31 = vld [vmem:[%s1 + $0x30] sm:$0xff]
  %v32 = vld [vmem:[%s1 + $0x38] sm:$0xff]
  %v33 = vld [vmem:[%s1 + $0x40] sm:$0xff]
  %v34 = vld [vmem:[%s1 + $0x48] sm:$0xff]
  %v35 = vld [vmem:[%s1 + $0x50] sm:$0xff]
  %v36 = vld [vmem:[%s1 + $0x58] sm:$0xff]
  %v37 = vld [vmem:[%s1 + $0x60] sm:$0xff]
  %v38 = vld [vmem:[%s1 + $0x68] sm:$0xff]
  %v39 = vld [vmem:[%s1 + $0x70] sm:$0xff]
  %v40 = vld [vmem:[%s1 + $0x78] sm:$0xff]
  %41 = vmatprep.subr.mxu0 0.0
  %42 = vmatpush1.msra.mxu0 %v25
  %43 = vmatprep.subr.mxu0 0.0
  %44 = vmatpush1.msra.mxu0 %v26
  %45 = vmatprep.subr.mxu0 0.0
  %46 = vmatpush1.msra.mxu0 %v27
  %47 = vmatprep.subr.mxu0 0.0
  %48 = vmatpush1.msra.mxu0 %v28
  %49 = vmatprep.subr.mxu0 0.0
  %50 = vmatpush1.msra.mxu0 %v29
  %51 = vmatprep.subr.mxu0 0.0
  %52 = vmatpush1.msra.mxu0 %v30
  %53 = vmatprep.subr.mxu0 0.0
  %54 = vmatpush1.msra.mxu0 %v31
  %55 = vmatprep.subr.mxu0 0.0
  %56 = vmatpush1.msra.mxu0 %v32
  %57 = vmatprep.subr.mxu0 0.0
  %58 = vmatpush1.msra.mxu0 %v33
  %59 = vmatprep.subr.mxu0 0.0
  %60 = vmatpush1.msra.mxu0 %v34
  %61 = vmatprep.subr.mxu0 0.0
  %62 = vmatpush1.msra.mxu0 %v35
  %63 = vmatprep.subr.mxu0 0.0
  %64 = vmatpush1.msra.mxu0 %v36
  %65 = vmatprep.subr.mxu0 0.0
  %66 = vmatpush1.msra.mxu0 %v37
  %67 = vmatprep.subr.mxu0 0.0
  %68 = vmatpush1.msra.mxu0 %v38
  %69 = vmatprep.subr.mxu0 0.0
  %70 = vmatpush1.msra.mxu0 %v39
  %71 = vmatprep.subr.mxu0 0.0
  %72 = vmatpush1.msra.mxu0 %v40
  %73 = vmatprep.subr.mxu0 0.0
  %74 = vmatpush1.msra.mxu0 0.0
  %75 = vmatprep.subr.mxu0 0.0
  %76 = vmatpush1.msra.mxu0 0.0
  %77 = vmatprep.subr.mxu0 0.0
  %78 = vmatpush1.msra.mxu0 0.0
  %79 = vmatprep.subr.mxu0 0.0
  %80 = vmatpush1.msra.mxu0 0.0
  %81 = vmatprep.subr.mxu0 0.0
  %82 = vmatpush1.msra.mxu0 0.0
  %83 = vmatprep.subr.mxu0 0.0
  %84 = vmatpush1.msra.mxu0 0.0
  %85 = vmatprep.subr.mxu0 0.0
  %86 = vmatpush1.msra.mxu0 0.0
  %87 = vmatprep.subr.mxu0 0.0
  %88 = vmatpush1.msra.mxu0 0.0
  %89 = vmatprep.subr.mxu0 0.0
  %90 = vmatpush1.msra.mxu0 0.0
  %91 = vmatprep.subr.mxu0 0.0
  %92 = vmatpush1.msra.mxu0 0.0
  %93 = vmatprep.subr.mxu0 0.0
  %94 = vmatpush1.msra.mxu0 0.0
  %95 = vmatprep.subr.mxu0 0.0
  %96 = vmatpush1.msra.mxu0 0.0
  %97 = vmatprep.subr.mxu0 0.0
  %98 = vmatpush1.msra.mxu0 0.0
  %99 = vmatprep.subr.mxu0 0.0
  %100 = vmatpush1.msra.mxu0 0.0
  %101 = vmatprep.subr.mxu0 0.0
  %102 = vmatpush1.msra.mxu0 0.0
  %103 = vmatprep.subr.mxu0 0.0
  %104 = vmatpush1.msra.mxu0 0.0
  %105 = vmatprep.mubr.f32.mxu0 0.0
  %106 = vmatmul.mubr.f32.gmra.mrb[0].mxu0 %v23
  %v107 = vpop.f32.mrb[0].mxu0
  %v108 = vadd.f32 0.0, %v107
  %v109 = vpop.f32.mrb[0].mxu0
  %110 = vmatprep.mubr.f32.mxu0 0.0
  %111 = vmatmul.mubr.f32.gmra.mrb[0].mxu0 %v24
  %v112 = vpop.f32.mrb[0].mxu0
  %v113 = vadd.f32 0.0, %v112
  %v114 = vpop.f32.mrb[0].mxu0
  %115 = vdwg.mxu0
  %v116 = vadd.f32 %v21, %v108
  %v117 = vadd.f32 %v22, %v113
  %vm118 = vcmask 261120
  %119 = vst.msk [vmem:[#allocation2] sm:$0xff] %vm118, %v116
  %120 = vst.msk [vmem:[#allocation2 + $0x8] sm:$0xff] %vm118, %v117
  // Predicated region
  $region18: #{transformer_forward.23} parent=0 // pred_check
    %p121 = pneg %p14
  $region19: #{transformer_forward.23} parent=0 // pred_check_branch
    %123 = sbr.rel (%p121) target = $region21
  $region20: #{transformer_forward.23} parent=0 // pred_region
    %v124 = vld [vmem:[#allocation2] sm:$0xff]
    %v125 = vld [vmem:[#allocation2 + $0x8] sm:$0xff]
    %v126 = vld [vmem:[%s2] sm:$0x1]
    %v128 = vlaneseq
    %v129 = vshrl.u32 %v128, 7
    %v130 = vsub.s32 0, %v129
    %v131 = vrot.slane %v126, %v130
    %v133 = vadd.f32 %v124, %v131
    %v134 = vadd.f32 %v125, %v131
    %135 = vst.msk [vmem:[%s3] sm:$0xff] %vm118, %v133
    %136 = vst.msk [vmem:[%s3 + $0x8] sm:$0xff] %vm118, %v134
  $region21: #{transformer_forward.23} parent=0 // pred_fallthru
    _
  // Predicated region
  $region22: #{transformer_forward.23} parent=0 // pred_check
    _
  $region23: #{transformer_forward.23} parent=0 // pred_check_branch
    %138 = sbr.rel (0) target = $region25
  $region24: #{transformer_forward.23} parent=0 // pred_region
    _
  $region25: #{transformer_forward.23} parent=0 // pred_fallthru
    _
  // Predicated region
  $region26: #{transformer_forward.23} parent=0 // pred_check
    _
  $region27: #{transformer_forward.23} parent=0 // pred_check_branch
    %140 = sbr.rel (0) target = $region29
  $region28: #{transformer_forward.23} parent=0 // pred_region
    _
  $region29: #{transformer_forward.23} parent=0 // pred_fallthru
    _

</llo_original>
